<compile_context>
chip_gen: v6e
topology: v6e:2x2x1
jax: 0.10.0
libtpu: 0.0.40
codegen_flags: <defaults>
</compile_context>

<pallas_src>
import jax
import jax.numpy as jnp
from jax.experimental import pallas as pl
from jax.experimental.pallas import tpu as pltpu

SCALE = 4.0
DROPOUT_P = 0.7
KEEP_P = 1.0 - DROPOUT_P
# dropout keep-test in integer space: keep iff uniform-uint32 bits < KEEP_P * 2^32
KEEP_THRESHOLD = int(KEEP_P * (1 << 32))


def _attn_dropout_kernel(q_ref, k_ref, v_ref, bits_ref, o_ref):
    # Lane-dense layout: batch is the last (lane) axis of every ref.
    q = q_ref[...]          # (S, D, TB)  f32
    k = k_ref[...]          # (S, D, TB)  f32
    v = v_ref[...]          # (S, D, TB)  f32

    # scores[qi, ki, 0, b] = sum_d q[qi, d, b] * k[ki, d, b]
    # (pure VPU multiply + sublane reduce; no MXU for an 8x8 contraction)
    s = jnp.sum(q[:, None, :, :] * k[None, :, :, :], axis=2, keepdims=True)
    s = s * (1.0 / SCALE)                          # (S, S, 1, TB)

    # softmax over the key axis (axis=1 is a leading axis -> plain VPU max/add)
    m = jnp.max(s, axis=1, keepdims=True)          # (S, 1, 1, TB)
    e = jnp.exp(s - m)                             # (S, S, 1, TB)
    denom = jnp.sum(e, axis=1, keepdims=True)      # (S, 1, 1, TB)
    p = e * (1.0 / denom)                          # reciprocal on the small tensor

    # dropout(p=0.7): keep with prob 0.3 via integer threshold on pre-drawn bits
    keep = bits_ref[...] < jnp.uint32(KEEP_THRESHOLD)   # (S, S, 1, TB) bool
    p = jnp.where(keep, p, 0.0)

    # out[qi, d, b] = (1/keep_p) * sum_ki p[qi, ki, b] * v[ki, d, b]
    o = jnp.sum(p * v[None, :, :, :], axis=1)      # (S, D, TB)
    o_ref[...] = (o * (1.0 / KEEP_P)).astype(o_ref.dtype)


def _compiler_params():
    # Parallel batch axis (2x on v7x's two TensorCores; harmless elsewhere).
    cp_cls = getattr(pltpu, "CompilerParams", None) or getattr(
        pltpu, "TPUCompilerParams", None)
    if cp_cls is None:
        return None
    try:
        return cp_cls(dimension_semantics=("parallel",))
    except Exception:
        return None


@jax.jit
def sdpa_dropout(q, k, v, dropout_bits):
    """q, k, v: (B, S, D) f32; dropout_bits: (B, S, S) uint32.
    Returns dropout(softmax(q @ k^T / 4), p=0.7) @ v as (B, S, D) f32."""
    B, S, D = q.shape

    # Lane-dense relayout (wrapper-side layout plumbing only): batch -> lane axis.
    qT = jnp.transpose(q, (1, 2, 0))                               # (S, D, B)
    kT = jnp.transpose(k, (1, 2, 0))                               # (S, D, B)
    vT = jnp.transpose(v, (1, 2, 0))                               # (S, D, B)
    bitsT = jnp.transpose(dropout_bits, (1, 2, 0))[:, :, None, :]  # (S, S, 1, B)

    # Batch tile on the lane axis: 128-lane tiles when possible, else whole batch.
    # Per-tile footprint is ~1 KiB * TB, far under every chip's scoped VMEM limit.
    TB = 128 if B % 128 == 0 else B
    grid = (B // TB,)

    qkv_spec = pl.BlockSpec((S, D, TB), lambda b: (0, 0, b))
    bits_spec = pl.BlockSpec((S, S, 1, TB), lambda b: (0, 0, 0, b))

    oT = pl.pallas_call(
        _attn_dropout_kernel,
        out_shape=jax.ShapeDtypeStruct((S, D, B), jnp.float32),
        grid=grid,
        in_specs=[qkv_spec, qkv_spec, qkv_spec, bits_spec],
        out_specs=pl.BlockSpec((S, D, TB), lambda b: (0, 0, b)),
        compiler_params=_compiler_params(),
    )(qT, kT, vT, bitsT)

    return jnp.transpose(oT, (2, 0, 1))                            # (B, S, D)


def _reference(q, k, v, dropout_bits):
    keep = dropout_bits < jnp.uint32(KEEP_THRESHOLD)
    s = jnp.einsum("bqd,bkd->bqk", q, k) / SCALE
    p = jax.nn.softmax(s, axis=-1)
    p = jnp.where(keep, p * (1.0 / KEEP_P), 0.0)
    return jnp.einsum("bqk,bkd->bqd", p, v)


if __name__ == "__main__":
    S, D = 8, 8
    key = jax.random.PRNGKey(0)

    # The torch module only uses len(inputs) -> batch size.  q/k/v are fresh
    # noise inside forward(); we sample them (and the dropout bits) here in the
    # wrapper with deterministic jax.random keys.
    for B in (2, 256):  # tiny batch + a lane-dense (128-lane tiled) batch
        kq, kk, kv, kd = jax.random.split(jax.random.fold_in(key, B), 4)
        q = jax.random.normal(kq, (B, S, D), dtype=jnp.float32)
        k = jax.random.normal(kk, (B, S, D), dtype=jnp.float32)
        v = jax.random.normal(kv, (B, S, D), dtype=jnp.float32)
        bits = jax.random.bits(kd, (B, S, S), dtype=jnp.uint32)

        out = sdpa_dropout(q, k, v, bits)
        jax.block_until_ready(out)
        assert out.shape == (B, S, D) and out.dtype == jnp.float32

        ref = _reference(q, k, v, bits)
        err = float(jnp.max(jnp.abs(out - ref)))
        assert jnp.allclose(out, ref, rtol=1e-4, atol=1e-4), f"max abs err {err}"

    print("KERNEL_OK")
</pallas_src>

<mosaic_0001>
module attributes {stable_mosaic.version = 11 : i64} {
  func.func @_attn_dropout_kernel(%arg0: i32, %arg1: memref<8x8x2xf32, #tpu.memory_space<vmem>>, %arg2: memref<8x8x2xf32, #tpu.memory_space<vmem>>, %arg3: memref<8x8x2xf32, #tpu.memory_space<vmem>>, %arg4: memref<8x8x1x2xi32, #tpu.memory_space<vmem>>, %arg5: memref<8x8x2xf32, #tpu.memory_space<vmem>>) attributes {dimension_semantics = [#tpu.dimension_semantics<parallel>], iteration_bounds = array<i64: 1>, scalar_prefetch = 0 : i64, scratch_operands = 0 : i64, tpu.core_type = #tpu.core_type<tc>, window_params = [{transform_indices = @transform_0, window_bounds = array<i64: 8, 8, 2>}, {transform_indices = @transform_1, window_bounds = array<i64: 8, 8, 2>}, {transform_indices = @transform_2, window_bounds = array<i64: 8, 8, 2>}, {transform_indices = @transform_3, window_bounds = array<i64: 8, 8, 1, 2>}, {transform_indices = @transform_4, window_bounds = array<i64: 8, 8, 2>}]} {
    %c0 = arith.constant 0 : index
    %c0_0 = arith.constant 0 : index
    %c0_1 = arith.constant 0 : index
    %0 = vector.load %arg1[%c0, %c0_0, %c0_1] : memref<8x8x2xf32, #tpu.memory_space<vmem>>, vector<8x8x2xf32>
    %c0_2 = arith.constant 0 : index
    %c0_3 = arith.constant 0 : index
    %c0_4 = arith.constant 0 : index
    %1 = vector.load %arg2[%c0_2, %c0_3, %c0_4] : memref<8x8x2xf32, #tpu.memory_space<vmem>>, vector<8x8x2xf32>
    %c0_5 = arith.constant 0 : index
    %c0_6 = arith.constant 0 : index
    %c0_7 = arith.constant 0 : index
    %2 = vector.load %arg3[%c0_5, %c0_6, %c0_7] : memref<8x8x2xf32, #tpu.memory_space<vmem>>, vector<8x8x2xf32>
    %3 = vector.shape_cast %0 : vector<8x8x2xf32> to vector<8x1x8x2xf32>
    %4 = vector.shape_cast %1 : vector<8x8x2xf32> to vector<1x8x8x2xf32>
    %5 = vector.broadcast %3 : vector<8x1x8x2xf32> to vector<8x8x8x2xf32>
    %6 = vector.broadcast %4 : vector<1x8x8x2xf32> to vector<8x8x8x2xf32>
    %7 = arith.mulf %5, %6 : vector<8x8x8x2xf32>
    %cst = arith.constant dense<0.000000e+00> : vector<8x8x2xf32>
    %8 = vector.multi_reduction <add>, %7, %cst [2] : vector<8x8x8x2xf32> to vector<8x8x2xf32>
    %9 = vector.shape_cast %8 : vector<8x8x2xf32> to vector<8x8x1x2xf32>
    %cst_8 = arith.constant 2.500000e-01 : f32
    %10 = vector.broadcast %cst_8 : f32 to vector<8x8x1x2xf32>
    %11 = arith.mulf %9, %10 : vector<8x8x1x2xf32>
    %cst_9 = arith.constant dense<0xFF800000> : vector<8x1x2xf32>
    %12 = vector.multi_reduction <maximumf>, %11, %cst_9 [1] : vector<8x8x1x2xf32> to vector<8x1x2xf32>
    %13 = vector.shape_cast %12 : vector<8x1x2xf32> to vector<8x1x1x2xf32>
    %14 = vector.broadcast %13 : vector<8x1x1x2xf32> to vector<8x8x1x2xf32>
    %15 = arith.subf %11, %14 : vector<8x8x1x2xf32>
    %16 = math.exp %15 : vector<8x8x1x2xf32>
    %cst_10 = arith.constant dense<0.000000e+00> : vector<8x1x2xf32>
    %17 = vector.multi_reduction <add>, %16, %cst_10 [1] : vector<8x8x1x2xf32> to vector<8x1x2xf32>
    %18 = vector.shape_cast %17 : vector<8x1x2xf32> to vector<8x1x1x2xf32>
    %cst_11 = arith.constant 1.000000e+00 : f32
    %19 = vector.broadcast %cst_11 : f32 to vector<8x1x1x2xf32>
    %20 = arith.divf %19, %18 : vector<8x1x1x2xf32>
    %21 = vector.broadcast %20 : vector<8x1x1x2xf32> to vector<8x8x1x2xf32>
    %22 = arith.mulf %16, %21 : vector<8x8x1x2xf32>
    %c0_12 = arith.constant 0 : index
    %c0_13 = arith.constant 0 : index
    %c0_14 = arith.constant 0 : index
    %c0_15 = arith.constant 0 : index
    %23 = vector.load %arg4[%c0_12, %c0_13, %c0_14, %c0_15] : memref<8x8x1x2xi32, #tpu.memory_space<vmem>>, vector<8x8x1x2xi32>
    %c1288490188_i32 = arith.constant 1288490188 : i32
    %24 = vector.broadcast %c1288490188_i32 : i32 to vector<8x8x1x2xi32>
    %25 = arith.cmpi ult, %23, %24 : vector<8x8x1x2xi32>
    %cst_16 = arith.constant 0.000000e+00 : f32
    %26 = vector.broadcast %cst_16 : f32 to vector<8x8x1x2xf32>
    %27 = arith.select %25, %22, %26 : vector<8x8x1x2xi1>, vector<8x8x1x2xf32>
    %28 = vector.shape_cast %2 : vector<8x8x2xf32> to vector<1x8x8x2xf32>
    %29 = vector.broadcast %27 : vector<8x8x1x2xf32> to vector<8x8x8x2xf32>
    %30 = vector.broadcast %28 : vector<1x8x8x2xf32> to vector<8x8x8x2xf32>
    %31 = arith.mulf %29, %30 : vector<8x8x8x2xf32>
    %cst_17 = arith.constant dense<0.000000e+00> : vector<8x8x2xf32>
    %32 = vector.multi_reduction <add>, %31, %cst_17 [1] : vector<8x8x8x2xf32> to vector<8x8x2xf32>
    %cst_18 = arith.constant 3.33333325 : f32
    %33 = vector.broadcast %cst_18 : f32 to vector<8x8x2xf32>
    %34 = arith.mulf %32, %33 : vector<8x8x2xf32>
    %c0_19 = arith.constant 0 : index
    %c0_20 = arith.constant 0 : index
    %c0_21 = arith.constant 0 : index
    %35 = vector.load %arg5[%c0_19, %c0_20, %c0_21] : memref<8x8x2xf32, #tpu.memory_space<vmem>>, vector<8x8x2xf32>
    tpu.vector_store %arg5[%c0_19, %c0_20, %c0_21], %34 {strides = array<i32>} : memref<8x8x2xf32, #tpu.memory_space<vmem>>, vector<8x8x2xf32>,
    return
  }
  func.func @transform_0(%arg0: i32) -> (i32, i32, i32) {
    %c0_i32 = arith.constant 0 : i32
    %c0_i32_0 = arith.constant 0 : i32
    %c0_i32_1 = arith.constant 0 : i32
    return %c0_i32, %c0_i32_0, %arg0 : i32, i32, i32
  }
  func.func @transform_1(%arg0: i32) -> (i32, i32, i32) {
    %c0_i32 = arith.constant 0 : i32
    %c0_i32_0 = arith.constant 0 : i32
    %c0_i32_1 = arith.constant 0 : i32
    return %c0_i32, %c0_i32_0, %arg0 : i32, i32, i32
  }
  func.func @transform_2(%arg0: i32) -> (i32, i32, i32) {
    %c0_i32 = arith.constant 0 : i32
    %c0_i32_0 = arith.constant 0 : i32
    %c0_i32_1 = arith.constant 0 : i32
    return %c0_i32, %c0_i32_0, %arg0 : i32, i32, i32
  }
  func.func @transform_3(%arg0: i32) -> (i32, i32, i32, i32) {
    %c0_i32 = arith.constant 0 : i32
    %c0_i32_0 = arith.constant 0 : i32
    %c0_i32_1 = arith.constant 0 : i32
    %c0_i32_2 = arith.constant 0 : i32
    return %c0_i32, %c0_i32_0, %c0_i32_1, %arg0 : i32, i32, i32, i32
  }
  func.func @transform_4(%arg0: i32) -> (i32, i32, i32) {
    %c0_i32 = arith.constant 0 : i32
    %c0_i32_0 = arith.constant 0 : i32
    %c0_i32_1 = arith.constant 0 : i32
    return %c0_i32, %c0_i32_0, %arg0 : i32, i32, i32
  }
}

</mosaic_0001>

<llo_original>
// kernel: sdpa_dropout.1
$region0: #{sdpa_dropout.1}
  #allocation0 [shape = 'u32[]', space=smem, size = 0x4, offset = 0x4, fixed_abs, tag = 'smem constant byte address 0x4 - core index']
  #allocation1 [shape = 'u32[144,128]{1,0:T(1,128)}', space=vmem, size = 0x12000, scoped, tag = 'internal scratch']
  %s0 = inlined_call_operand.vmem [shape: f32[8,8,2], index: 0, kind: input, shape index: {}]
  %s1 = inlined_call_operand.vmem [shape: f32[8,8,2], index: 1, kind: input, shape index: {}]
  %s2 = inlined_call_operand.vmem [shape: f32[8,8,2], index: 2, kind: input, shape index: {}]
  %s3 = inlined_call_operand.vmem [shape: u32[8,8,1,2], index: 3, kind: input, shape index: {}]
  %s4 = inlined_call_operand.vmem [shape: f32[8,8,2], index: 4, kind: output, shape index: {}]
  %s5 = sld [smem:[#allocation0]]
  $region26: #{sdpa_dropout.1} parent=0
    _
  %s7 = ssub.s32 1, %s5
  %s8 = scalar_select 0, %s7, %s5
  // Predicated region
  $region2: #{sdpa_dropout.1} parent=0 // pred_check
    _
  $region3: #{sdpa_dropout.1} parent=0 // pred_check_branch
    %10 = sbr.rel (0) target = $region5
  $region4: #{sdpa_dropout.1} parent=0 // pred_region
    _
  $region5: #{sdpa_dropout.1} parent=0 // pred_fallthru
    _
  // Predicated region
  $region6: #{sdpa_dropout.1} parent=0 // pred_check
    _
  $region7: #{sdpa_dropout.1} parent=0 // pred_check_branch
    %12 = sbr.rel (0) target = $region9
  $region8: #{sdpa_dropout.1} parent=0 // pred_region
    _
  $region9: #{sdpa_dropout.1} parent=0 // pred_fallthru
    _
  // Predicated region
  $region10: #{sdpa_dropout.1} parent=0 // pred_check
    _
  $region11: #{sdpa_dropout.1} parent=0 // pred_check_branch
    %14 = sbr.rel (0) target = $region13
  $region12: #{sdpa_dropout.1} parent=0 // pred_region
    _
  $region13: #{sdpa_dropout.1} parent=0 // pred_fallthru
    _
  // Predicated region
  $region14: #{sdpa_dropout.1} parent=0 // pred_check
    _
  $region15: #{sdpa_dropout.1} parent=0 // pred_check_branch
    %16 = sbr.rel (0) target = $region17
  $region16: #{sdpa_dropout.1} parent=0 // pred_region
    _
  $region17: #{sdpa_dropout.1} parent=0 // pred_fallthru
    _
  %v17 = vld [vmem:[%s0] sm:$0xff]
  %v18 = vld [vmem:[%s0 + $0x8] sm:$0xff]
  %v19 = vld [vmem:[%s0 + $0x10] sm:$0xff]
  %v20 = vld [vmem:[%s0 + $0x18] sm:$0xff]
  %v21 = vld [vmem:[%s0 + $0x20] sm:$0xff]
  %v22 = vld [vmem:[%s0 + $0x28] sm:$0xff]
  %v23 = vld [vmem:[%s0 + $0x30] sm:$0xff]
  %v24 = vld [vmem:[%s0 + $0x38] sm:$0xff]
  %v25 = vld [vmem:[%s1] sm:$0xff]
  %v26 = vld [vmem:[%s1 + $0x8] sm:$0xff]
  %v27 = vld [vmem:[%s1 + $0x10] sm:$0xff]
  %v28 = vld [vmem:[%s1 + $0x18] sm:$0xff]
  %v29 = vld [vmem:[%s1 + $0x20] sm:$0xff]
  %v30 = vld [vmem:[%s1 + $0x28] sm:$0xff]
  %v31 = vld [vmem:[%s1 + $0x30] sm:$0xff]
  %v32 = vld [vmem:[%s1 + $0x38] sm:$0xff]
  %v33 = vld [vmem:[%s2] sm:$0xff]
  %v34 = vld [vmem:[%s2 + $0x8] sm:$0xff]
  %v35 = vld [vmem:[%s2 + $0x10] sm:$0xff]
  %v36 = vld [vmem:[%s2 + $0x18] sm:$0xff]
  %v37 = vld [vmem:[%s2 + $0x20] sm:$0xff]
  %v38 = vld [vmem:[%s2 + $0x28] sm:$0xff]
  %v39 = vld [vmem:[%s2 + $0x30] sm:$0xff]
  %v40 = vld [vmem:[%s2 + $0x38] sm:$0xff]
  %v41 = vmul.f32 %v17, %v25
  %v42 = vmul.f32 %v17, %v26
  %v43 = vmul.f32 %v17, %v27
  %v44 = vmul.f32 %v17, %v28
  %v45 = vmul.f32 %v17, %v29
  %v46 = vmul.f32 %v17, %v30
  %v47 = vmul.f32 %v17, %v31
  %v48 = vmul.f32 %v17, %v32
  %v49 = vmul.f32 %v18, %v25
  %v50 = vmul.f32 %v18, %v26
  %v51 = vmul.f32 %v18, %v27
  %v52 = vmul.f32 %v18, %v28
  %v53 = vmul.f32 %v18, %v29
  %v54 = vmul.f32 %v18, %v30
  %v55 = vmul.f32 %v18, %v31
  %v56 = vmul.f32 %v18, %v32
  %v57 = vmul.f32 %v19, %v25
  %v58 = vmul.f32 %v19, %v26
  %v59 = vmul.f32 %v19, %v27
  %v60 = vmul.f32 %v19, %v28
  %v61 = vmul.f32 %v19, %v29
  %v62 = vmul.f32 %v19, %v30
  %v63 = vmul.f32 %v19, %v31
  %v64 = vmul.f32 %v19, %v32
  %v65 = vmul.f32 %v20, %v25
  %v66 = vmul.f32 %v20, %v26
  %v67 = vmul.f32 %v20, %v27
  %v68 = vmul.f32 %v20, %v28
  %v69 = vmul.f32 %v20, %v29
  %v70 = vmul.f32 %v20, %v30
  %v71 = vmul.f32 %v20, %v31
  %v72 = vmul.f32 %v20, %v32
  %v73 = vmul.f32 %v21, %v25
  %v74 = vmul.f32 %v21, %v26
  %v75 = vmul.f32 %v21, %v27
  %v76 = vmul.f32 %v21, %v28
  %v77 = vmul.f32 %v21, %v29
  %v78 = vmul.f32 %v21, %v30
  %v79 = vmul.f32 %v21, %v31
  %v80 = vmul.f32 %v21, %v32
  %v81 = vmul.f32 %v22, %v25
  %v82 = vmul.f32 %v22, %v26
  %v83 = vmul.f32 %v22, %v27
  %v84 = vmul.f32 %v22, %v28
  %v85 = vmul.f32 %v22, %v29
  %v86 = vmul.f32 %v22, %v30
  %v87 = vmul.f32 %v22, %v31
  %v88 = vmul.f32 %v22, %v32
  %v89 = vmul.f32 %v23, %v25
  %v90 = vmul.f32 %v23, %v26
  %v91 = vmul.f32 %v23, %v27
  %v92 = vmul.f32 %v23, %v28
  %v93 = vmul.f32 %v23, %v29
  %v94 = vmul.f32 %v23, %v30
  %v95 = vmul.f32 %v23, %v31
  %v96 = vmul.f32 %v23, %v32
  %v97 = vmul.f32 %v24, %v25
  %v98 = vmul.f32 %v24, %v26
  %v99 = vmul.f32 %v24, %v27
  %v100 = vmul.f32 %v24, %v28
  %v101 = vmul.f32 %v24, %v29
  %v102 = vmul.f32 %v24, %v30
  %v103 = vmul.f32 %v24, %v31
  %v104 = vmul.f32 %v24, %v32
  %vm105 = vcmask 15360
  %v106 = vsel %vm105, %v41, 0.0
  %v107 = vrot.slane %v106, 4
  %v108 = vadd.f32 %v106, %v107
  %v109 = vrot.slane %v108, 2
  %v110 = vadd.f32 %v108, %v109
  %v111 = vrot.slane %v110, 1
  %v112 = vadd.f32 %v110, %v111
  %v113 = vsel %vm105, %v42, 0.0
  %v114 = vrot.slane %v113, 4
  %v115 = vadd.f32 %v113, %v114
  %v116 = vrot.slane %v115, 2
  %v117 = vadd.f32 %v115, %v116
  %v118 = vrot.slane %v117, 1
  %v119 = vadd.f32 %v117, %v118
  %v120 = vsel %vm105, %v43, 0.0
  %v121 = vrot.slane %v120, 4
  %v122 = vadd.f32 %v120, %v121
  %v123 = vrot.slane %v122, 2
  %v124 = vadd.f32 %v122, %v123
  %v125 = vrot.slane %v124, 1
  %v126 = vadd.f32 %v124, %v125
  %v127 = vsel %vm105, %v44, 0.0
  %v128 = vrot.slane %v127, 4
  %v129 = vadd.f32 %v127, %v128
  %v130 = vrot.slane %v129, 2
  %v131 = vadd.f32 %v129, %v130
  %v132 = vrot.slane %v131, 1
  %v133 = vadd.f32 %v131, %v132
  %v134 = vsel %vm105, %v45, 0.0
  %v135 = vrot.slane %v134, 4
  %v136 = vadd.f32 %v134, %v135
  %v137 = vrot.slane %v136, 2
  %v138 = vadd.f32 %v136, %v137
  %v139 = vrot.slane %v138, 1
  %v140 = vadd.f32 %v138, %v139
  %v141 = vsel %vm105, %v46, 0.0
  %v142 = vrot.slane %v141, 4
  %v143 = vadd.f32 %v141, %v142
  %v144 = vrot.slane %v143, 2
  %v145 = vadd.f32 %v143, %v144
  %v146 = vrot.slane %v145, 1
  %v147 = vadd.f32 %v145, %v146
  %v148 = vsel %vm105, %v47, 0.0
  %v149 = vrot.slane %v148, 4
  %v150 = vadd.f32 %v148, %v149
  %v151 = vrot.slane %v150, 2
  %v152 = vadd.f32 %v150, %v151
  %v153 = vrot.slane %v152, 1
  %v154 = vadd.f32 %v152, %v153
  %v155 = vsel %vm105, %v48, 0.0
  %v156 = vrot.slane %v155, 4
  %v157 = vadd.f32 %v155, %v156
  %v158 = vrot.slane %v157, 2
  %v159 = vadd.f32 %v157, %v158
  %v160 = vrot.slane %v159, 1
  %v161 = vadd.f32 %v159, %v160
  %v162 = vsel %vm105, %v49, 0.0
  %v163 = vrot.slane %v162, 4
  %v164 = vadd.f32 %v162, %v163
  %v165 = vrot.slane %v164, 2
  %v166 = vadd.f32 %v164, %v165
  %v167 = vrot.slane %v166, 1
  %v168 = vadd.f32 %v166, %v167
  %v169 = vsel %vm105, %v50, 0.0
  %v170 = vrot.slane %v169, 4
  %v171 = vadd.f32 %v169, %v170
  %v172 = vrot.slane %v171, 2
  %v173 = vadd.f32 %v171, %v172
  %v174 = vrot.slane %v173, 1
  %v175 = vadd.f32 %v173, %v174
  %v176 = vsel %vm105, %v51, 0.0
  %v177 = vrot.slane %v176, 4
  %v178 = vadd.f32 %v176, %v177
  %v179 = vrot.slane %v178, 2
  %v180 = vadd.f32 %v178, %v179
  %v181 = vrot.slane %v180, 1
  %v182 = vadd.f32 %v180, %v181
  %v183 = vsel %vm105, %v52, 0.0
  %v184 = vrot.slane %v183, 4
  %v185 = vadd.f32 %v183, %v184
  %v186 = vrot.slane %v185, 2
  %v187 = vadd.f32 %v185, %v186
  %v188 = vrot.slane %v187, 1
  %v189 = vadd.f32 %v187, %v188
  %v190 = vsel %vm105, %v53, 0.0
  %v191 = vrot.slane %v190, 4
  %v192 = vadd.f32 %v190, %v191
  %v193 = vrot.slane %v192, 2
  %v194 = vadd.f32 %v192, %v193
  %v195 = vrot.slane %v194, 1
  %v196 = vadd.f32 %v194, %v195
  %v197 = vsel %vm105, %v54, 0.0
  %v198 = vrot.slane %v197, 4
  %v199 = vadd.f32 %v197, %v198
  %v200 = vrot.slane %v199, 2
  %v201 = vadd.f32 %v199, %v200
  %v202 = vrot.slane %v201, 1
  %v203 = vadd.f32 %v201, %v202
  %v204 = vsel %vm105, %v55, 0.0
  %v205 = vrot.slane %v204, 4
  %v206 = vadd.f32 %v204, %v205
  %v207 = vrot.slane %v206, 2
  %v208 = vadd.f32 %v206, %v207
  %v209 = vrot.slane %v208, 1
  %v210 = vadd.f32 %v208, %v209
  %v211 = vsel %vm105, %v56, 0.0
  %v212 = vrot.slane %v211, 4
  %v213 = vadd.f32 %v211, %v212
  %v214 = vrot.slane %v213, 2
  %v215 = vadd.f32 %v213, %v214
  %v216 = vrot.slane %v215, 1
  %v217 = vadd.f32 %v215, %v216
  %v218 = vsel %vm105, %v57, 0.0
  %v219 = vrot.slane %v218, 4
  %v220 = vadd.f32 %v218, %v219
  %v221 = vrot.slane %v220, 2
  %v222 = vadd.f32 %v220, %v221
  %v223 = vrot.slane %v222, 1
  %v224 = vadd.f32 %v222, %v223
  %v225 = vsel %vm105, %v58, 0.0
  %v226 = vrot.slane %v225, 4
  %v227 = vadd.f32 %v225, %v226
  %v228 = vrot.slane %v227, 2
  %v229 = vadd.f32 %v227, %v228
  %v230 = vrot.slane %v229, 1
  %v231 = vadd.f32 %v229, %v230
  %v232 = vsel %vm105, %v59, 0.0
  %v233 = vrot.slane %v232, 4
  %v234 = vadd.f32 %v232, %v233
  %v235 = vrot.slane %v234, 2
  %v236 = vadd.f32 %v234, %v235
  %v237 = vrot.slane %v236, 1
  %v238 = vadd.f32 %v236, %v237
  %v239 = vsel %vm105, %v60, 0.0
  %v240 = vrot.slane %v239, 4
  %v241 = vadd.f32 %v239, %v240
  %v242 = vrot.slane %v241, 2
  %v243 = vadd.f32 %v241, %v242
  %v244 = vrot.slane %v243, 1
  %v245 = vadd.f32 %v243, %v244
  %v246 = vsel %vm105, %v61, 0.0
  %v247 = vrot.slane %v246, 4
  %v248 = vadd.f32 %v246, %v247
  %v249 = vrot.slane %v248, 2
  %v250 = vadd.f32 %v248, %v249
  %v251 = vrot.slane %v250, 1
  %v252 = vadd.f32 %v250, %v251
  %v253 = vsel %vm105, %v62, 0.0
  %v254 = vrot.slane %v253, 4
  %v255 = vadd.f32 %v253, %v254
  %v256 = vrot.slane %v255, 2
  %v257 = vadd.f32 %v255, %v256
  %v258 = vrot.slane %v257, 1
  %v259 = vadd.f32 %v257, %v258
  %v260 = vsel %vm105, %v63, 0.0
  %v261 = vrot.slane %v260, 4
  %v262 = vadd.f32 %v260, %v261
  %v263 = vrot.slane %v262, 2
  %v264 = vadd.f32 %v262, %v263
  %v265 = vrot.slane %v264, 1
  %v266 = vadd.f32 %v264, %v265
  %v267 = vsel %vm105, %v64, 0.0
  %v268 = vrot.slane %v267, 4
  %v269 = vadd.f32 %v267, %v268
  %v270 = vrot.slane %v269, 2
  %v271 = vadd.f32 %v269, %v270
  %v272 = vrot.slane %v271, 1
  %v273 = vadd.f32 %v271, %v272
  %v274 = vsel %vm105, %v65, 0.0
  %v275 = vrot.slane %v274, 4
  %v276 = vadd.f32 %v274, %v275
  %v277 = vrot.slane %v276, 2
  %v278 = vadd.f32 %v276, %v277
  %v279 = vrot.slane %v278, 1
  %v280 = vadd.f32 %v278, %v279
  %v281 = vsel %vm105, %v66, 0.0
  %v282 = vrot.slane %v281, 4
  %v283 = vadd.f32 %v281, %v282
  %v284 = vrot.slane %v283, 2
  %v285 = vadd.f32 %v283, %v284
  %v286 = vrot.slane %v285, 1
  %v287 = vadd.f32 %v285, %v286
  %v288 = vsel %vm105, %v67, 0.0
  %v289 = vrot.slane %v288, 4
  %v290 = vadd.f32 %v288, %v289
  %v291 = vrot.slane %v290, 2
  %v292 = vadd.f32 %v290, %v291
  %v293 = vrot.slane %v292, 1
  %v294 = vadd.f32 %v292, %v293
  %v295 = vsel %vm105, %v68, 0.0
  %v296 = vrot.slane %v295, 4
  %v297 = vadd.f32 %v295, %v296
  %v298 = vrot.slane %v297, 2
  %v299 = vadd.f32 %v297, %v298
  %v300 = vrot.slane %v299, 1
  %v301 = vadd.f32 %v299, %v300
  %v302 = vsel %vm105, %v69, 0.0
  %v303 = vrot.slane %v302, 4
  %v304 = vadd.f32 %v302, %v303
  %v305 = vrot.slane %v304, 2
  %v306 = vadd.f32 %v304, %v305
  %v307 = vrot.slane %v306, 1
  %v308 = vadd.f32 %v306, %v307
  %v309 = vsel %vm105, %v70, 0.0
  %v310 = vrot.slane %v309, 4
  %v311 = vadd.f32 %v309, %v310
  %v312 = vrot.slane %v311, 2
  %v313 = vadd.f32 %v311, %v312
  %v314 = vrot.slane %v313, 1
  %v315 = vadd.f32 %v313, %v314
  %v316 = vsel %vm105, %v71, 0.0
  %v317 = vrot.slane %v316, 4
  %v318 = vadd.f32 %v316, %v317
  %v319 = vrot.slane %v318, 2
  %v320 = vadd.f32 %v318, %v319
  %v321 = vrot.slane %v320, 1
  %v322 = vadd.f32 %v320, %v321
  %v323 = vsel %vm105, %v72, 0.0
  %v324 = vrot.slane %v323, 4
  %v325 = vadd.f32 %v323, %v324
  %v326 = vrot.slane %v325, 2
  %v327 = vadd.f32 %v325, %v326
  %v328 = vrot.slane %v327, 1
  %v329 = vadd.f32 %v327, %v328
  %v330 = vsel %vm105, %v73, 0.0
  %v331 = vrot.slane %v330, 4
  %v332 = vadd.f32 %v330, %v331
  %v333 = vrot.slane %v332, 2
  %v334 = vadd.f32 %v332, %v333
  %v335 = vrot.slane %v334, 1
  %v336 = vadd.f32 %v334, %v335
  %v337 = vsel %vm105, %v74, 0.0
  %v338 = vrot.slane %v337, 4
  %v339 = vadd.f32 %v337, %v338
  %v340 = vrot.slane %v339, 2
  %v341 = vadd.f32 %v339, %v340
  %v342 = vrot.slane %v341, 1
  %v343 = vadd.f32 %v341, %v342
  %v344 = vsel %vm105, %v75, 0.0
  %v345 = vrot.slane %v344, 4
  %v346 = vadd.f32 %v344, %v345
  %v347 = vrot.slane %v346, 2
  %v348 = vadd.f32 %v346, %v347
  %v349 = vrot.slane %v348, 1
  %v350 = vadd.f32 %v348, %v349
  %v351 = vsel %vm105, %v76, 0.0
  %v352 = vrot.slane %v351, 4
  %v353 = vadd.f32 %v351, %v352
  %v354 = vrot.slane %v353, 2
  %v355 = vadd.f32 %v353, %v354
  %v356 = vrot.slane %v355, 1
  %v357 = vadd.f32 %v355, %v356
  %v358 = vsel %vm105, %v77, 0.0
  %v359 = vrot.slane %v358, 4
  %v360 = vadd.f32 %v358, %v359
  %v361 = vrot.slane %v360, 2
  %v362 = vadd.f32 %v360, %v361
  %v363 = vrot.slane %v362, 1
  %v364 = vadd.f32 %v362, %v363
  %v365 = vsel %vm105, %v78, 0.0
  %v366 = vrot.slane %v365, 4
  %v367 = vadd.f32 %v365, %v366
  %v368 = vrot.slane %v367, 2
  %v369 = vadd.f32 %v367, %v368
  %v370 = vrot.slane %v369, 1
  %v371 = vadd.f32 %v369, %v370
  %v372 = vsel %vm105, %v79, 0.0
  %v373 = vrot.slane %v372, 4
  %v374 = vadd.f32 %v372, %v373
  %v375 = vrot.slane %v374, 2
  %v376 = vadd.f32 %v374, %v375
  %v377 = vrot.slane %v376, 1
  %v378 = vadd.f32 %v376, %v377
  %v379 = vsel %vm105, %v80, 0.0
  %v380 = vrot.slane %v379, 4
  %v381 = vadd.f32 %v379, %v380
  %v382 = vrot.slane %v381, 2
  %v383 = vadd.f32 %v381, %v382
  %v384 = vrot.slane %v383, 1
  %v385 = vadd.f32 %v383, %v384
  %v386 = vsel %vm105, %v81, 0.0
  %v387 = vrot.slane %v386, 4
  %v388 = vadd.f32 %v386, %v387
  %v389 = vrot.slane %v388, 2
  %v390 = vadd.f32 %v388, %v389
  %v391 = vrot.slane %v390, 1
  %v392 = vadd.f32 %v390, %v391
  %v393 = vsel %vm105, %v82, 0.0
  %v394 = vrot.slane %v393, 4
  %v395 = vadd.f32 %v393, %v394
  %v396 = vrot.slane %v395, 2
  %v397 = vadd.f32 %v395, %v396
  %v398 = vrot.slane %v397, 1
  %v399 = vadd.f32 %v397, %v398
  %v400 = vsel %vm105, %v83, 0.0
  %v401 = vrot.slane %v400, 4
  %v402 = vadd.f32 %v400, %v401
  %v403 = vrot.slane %v402, 2
  %v404 = vadd.f32 %v402, %v403
  %v405 = vrot.slane %v404, 1
  %v406 = vadd.f32 %v404, %v405
  %v407 = vsel %vm105, %v84, 0.0
  %v408 = vrot.slane %v407, 4
  %v409 = vadd.f32 %v407, %v408
  %v410 = vrot.slane %v409, 2
  %v411 = vadd.f32 %v409, %v410
  %v412 = vrot.slane %v411, 1
  %v413 = vadd.f32 %v411, %v412
  %v414 = vsel %vm105, %v85, 0.0
  %v415 = vrot.slane %v414, 4
  %v416 = vadd.f32 %v414, %v415
  %v417 = vrot.slane %v416, 2
  %v418 = vadd.f32 %v416, %v417
  %v419 = vrot.slane %v418, 1
  %v420 = vadd.f32 %v418, %v419
  %v421 = vsel %vm105, %v86, 0.0
  %v422 = vrot.slane %v421, 4
  %v423 = vadd.f32 %v421, %v422
  %v424 = vrot.slane %v423, 2
  %v425 = vadd.f32 %v423, %v424
  %v426 = vrot.slane %v425, 1
  %v427 = vadd.f32 %v425, %v426
  %v428 = vsel %vm105, %v87, 0.0
  %v429 = vrot.slane %v428, 4
  %v430 = vadd.f32 %v428, %v429
  %v431 = vrot.slane %v430, 2
  %v432 = vadd.f32 %v430, %v431
  %v433 = vrot.slane %v432, 1
  %v434 = vadd.f32 %v432, %v433
  %v435 = vsel %vm105, %v88, 0.0
  %v436 = vrot.slane %v435, 4
  %v437 = vadd.f32 %v435, %v436
  %v438 = vrot.slane %v437, 2
  %v439 = vadd.f32 %v437, %v438
  %v440 = vrot.slane %v439, 1
  %v441 = vadd.f32 %v439, %v440
  %v442 = vsel %vm105, %v89, 0.0
  %v443 = vrot.slane %v442, 4
  %v444 = vadd.f32 %v442, %v443
  %v445 = vrot.slane %v444, 2
  %v446 = vadd.f32 %v444, %v445
  %v447 = vrot.slane %v446, 1
  %v448 = vadd.f32 %v446, %v447
  %v449 = vsel %vm105, %v90, 0.0
  %v450 = vrot.slane %v449, 4
  %v451 = vadd.f32 %v449, %v450
  %v452 = vrot.slane %v451, 2
  %v453 = vadd.f32 %v451, %v452
  %v454 = vrot.slane %v453, 1
  %v455 = vadd.f32 %v453, %v454
  %v456 = vsel %vm105, %v91, 0.0
  %v457 = vrot.slane %v456, 4
  %v458 = vadd.f32 %v456, %v457
  %v459 = vrot.slane %v458, 2
  %v460 = vadd.f32 %v458, %v459
  %v461 = vrot.slane %v460, 1
  %v462 = vadd.f32 %v460, %v461
  %v463 = vsel %vm105, %v92, 0.0
  %v464 = vrot.slane %v463, 4
  %v465 = vadd.f32 %v463, %v464
  %v466 = vrot.slane %v465, 2
  %v467 = vadd.f32 %v465, %v466
  %v468 = vrot.slane %v467, 1
  %v469 = vadd.f32 %v467, %v468
  %v470 = vsel %vm105, %v93, 0.0
  %v471 = vrot.slane %v470, 4
  %v472 = vadd.f32 %v470, %v471
  %v473 = vrot.slane %v472, 2
  %v474 = vadd.f32 %v472, %v473
  %v475 = vrot.slane %v474, 1
  %v476 = vadd.f32 %v474, %v475
  %v477 = vsel %vm105, %v94, 0.0
  %v478 = vrot.slane %v477, 4
  %v479 = vadd.f32 %v477, %v478
  %v480 = vrot.slane %v479, 2
  %v481 = vadd.f32 %v479, %v480
  %v482 = vrot.slane %v481, 1
  %v483 = vadd.f32 %v481, %v482
  %v484 = vsel %vm105, %v95, 0.0
  %v485 = vrot.slane %v484, 4
  %v486 = vadd.f32 %v484, %v485
  %v487 = vrot.slane %v486, 2
  %v488 = vadd.f32 %v486, %v487
  %v489 = vrot.slane %v488, 1
  %v490 = vadd.f32 %v488, %v489
  %v491 = vsel %vm105, %v96, 0.0
  %v492 = vrot.slane %v491, 4
  %v493 = vadd.f32 %v491, %v492
  %v494 = vrot.slane %v493, 2
  %v495 = vadd.f32 %v493, %v494
  %v496 = vrot.slane %v495, 1
  %v497 = vadd.f32 %v495, %v496
  %v498 = vsel %vm105, %v97, 0.0
  %v499 = vrot.slane %v498, 4
  %v500 = vadd.f32 %v498, %v499
  %v501 = vrot.slane %v500, 2
  %v502 = vadd.f32 %v500, %v501
  %v503 = vrot.slane %v502, 1
  %v504 = vadd.f32 %v502, %v503
  %v505 = vsel %vm105, %v98, 0.0
  %v506 = vrot.slane %v505, 4
  %v507 = vadd.f32 %v505, %v506
  %v508 = vrot.slane %v507, 2
  %v509 = vadd.f32 %v507, %v508
  %v510 = vrot.slane %v509, 1
  %v511 = vadd.f32 %v509, %v510
  %v512 = vsel %vm105, %v99, 0.0
  %v513 = vrot.slane %v512, 4
  %v514 = vadd.f32 %v512, %v513
  %v515 = vrot.slane %v514, 2
  %v516 = vadd.f32 %v514, %v515
  %v517 = vrot.slane %v516, 1
  %v518 = vadd.f32 %v516, %v517
  %v519 = vsel %vm105, %v100, 0.0
  %v520 = vrot.slane %v519, 4
  %v521 = vadd.f32 %v519, %v520
  %v522 = vrot.slane %v521, 2
  %v523 = vadd.f32 %v521, %v522
  %v524 = vrot.slane %v523, 1
  %v525 = vadd.f32 %v523, %v524
  %v526 = vsel %vm105, %v101, 0.0
  %v527 = vrot.slane %v526, 4
  %v528 = vadd.f32 %v526, %v527
  %v529 = vrot.slane %v528, 2
  %v530 = vadd.f32 %v528, %v529
  %v531 = vrot.slane %v530, 1
  %v532 = vadd.f32 %v530, %v531
  %v533 = vsel %vm105, %v102, 0.0
  %v534 = vrot.slane %v533, 4
  %v535 = vadd.f32 %v533, %v534
  %v536 = vrot.slane %v535, 2
  %v537 = vadd.f32 %v535, %v536
  %v538 = vrot.slane %v537, 1
  %v539 = vadd.f32 %v537, %v538
  %v540 = vsel %vm105, %v103, 0.0
  %v541 = vrot.slane %v540, 4
  %v542 = vadd.f32 %v540, %v541
  %v543 = vrot.slane %v542, 2
  %v544 = vadd.f32 %v542, %v543
  %v545 = vrot.slane %v544, 1
  %v546 = vadd.f32 %v544, %v545
  %v547 = vsel %vm105, %v104, 0.0
  %v548 = vrot.slane %v547, 4
  %v549 = vadd.f32 %v547, %v548
  %v550 = vrot.slane %v549, 2
  %v551 = vadd.f32 %v549, %v550
  %v552 = vrot.slane %v551, 1
  %v553 = vadd.f32 %v551, %v552
  %v554 = vmul.f32 %v112, 0.25
  %v555 = vmul.f32 %v119, 0.25
  %v556 = vmul.f32 %v126, 0.25
  %v557 = vmul.f32 %v133, 0.25
  %v558 = vmul.f32 %v140, 0.25
  %v559 = vmul.f32 %v147, 0.25
  %v560 = vmul.f32 %v154, 0.25
  %v561 = vmul.f32 %v161, 0.25
  %v562 = vmul.f32 %v168, 0.25
  %v563 = vmul.f32 %v175, 0.25
  %v564 = vmul.f32 %v182, 0.25
  %v565 = vmul.f32 %v189, 0.25
  %v566 = vmul.f32 %v196, 0.25
  %v567 = vmul.f32 %v203, 0.25
  %v568 = vmul.f32 %v210, 0.25
  %v569 = vmul.f32 %v217, 0.25
  %v570 = vmul.f32 %v224, 0.25
  %v571 = vmul.f32 %v231, 0.25
  %v572 = vmul.f32 %v238, 0.25
  %v573 = vmul.f32 %v245, 0.25
  %v574 = vmul.f32 %v252, 0.25
  %v575 = vmul.f32 %v259, 0.25
  %v576 = vmul.f32 %v266, 0.25
  %v577 = vmul.f32 %v273, 0.25
  %v578 = vmul.f32 %v280, 0.25
  %v579 = vmul.f32 %v287, 0.25
  %v580 = vmul.f32 %v294, 0.25
  %v581 = vmul.f32 %v301, 0.25
  %v582 = vmul.f32 %v308, 0.25
  %v583 = vmul.f32 %v315, 0.25
  %v584 = vmul.f32 %v322, 0.25
  %v585 = vmul.f32 %v329, 0.25
  %v586 = vmul.f32 %v336, 0.25
  %v587 = vmul.f32 %v343, 0.25
  %v588 = vmul.f32 %v350, 0.25
  %v589 = vmul.f32 %v357, 0.25
  %v590 = vmul.f32 %v364, 0.25
  %v591 = vmul.f32 %v371, 0.25
  %v592 = vmul.f32 %v378, 0.25
  %v593 = vmul.f32 %v385, 0.25
  %v594 = vmul.f32 %v392, 0.25
  %v595 = vmul.f32 %v399, 0.25
  %v596 = vmul.f32 %v406, 0.25
  %v597 = vmul.f32 %v413, 0.25
  %v598 = vmul.f32 %v420, 0.25
  %v599 = vmul.f32 %v427, 0.25
  %v600 = vmul.f32 %v434, 0.25
  %v601 = vmul.f32 %v441, 0.25
  %v602 = vmul.f32 %v448, 0.25
  %v603 = vmul.f32 %v455, 0.25
  %v604 = vmul.f32 %v462, 0.25
  %v605 = vmul.f32 %v469, 0.25
  %v606 = vmul.f32 %v476, 0.25
  %v607 = vmul.f32 %v483, 0.25
  %v608 = vmul.f32 %v490, 0.25
  %v609 = vmul.f32 %v497, 0.25
  %v610 = vmul.f32 %v504, 0.25
  %v611 = vmul.f32 %v511, 0.25
  %v612 = vmul.f32 %v518, 0.25
  %v613 = vmul.f32 %v525, 0.25
  %v614 = vmul.f32 %v532, 0.25
  %v615 = vmul.f32 %v539, 0.25
  %v616 = vmul.f32 %v546, 0.25
  %v617 = vmul.f32 %v553, 0.25
  %v618 = vsel %vm105, %v554, -inf
  %v619 = vsel %vm105, %v555, -inf
  %v620 = vmax.f32 %v618, %v619
  %v621 = vsel %vm105, %v556, -inf
  %v622 = vmax.f32 %v620, %v621
  %v623 = vsel %vm105, %v557, -inf
  %v624 = vmax.f32 %v622, %v623
  %v625 = vsel %vm105, %v558, -inf
  %v626 = vmax.f32 %v624, %v625
  %v627 = vsel %vm105, %v559, -inf
  %v628 = vmax.f32 %v626, %v627
  %v629 = vsel %vm105, %v560, -inf
  %v630 = vmax.f32 %v628, %v629
  %v631 = vsel %vm105, %v561, -inf
  %v632 = vmax.f32 %v630, %v631
  %v633 = vsel %vm105, %v562, -inf
  %v634 = vsel %vm105, %v563, -inf
  %v635 = vmax.f32 %v633, %v634
  %v636 = vsel %vm105, %v564, -inf
  %v637 = vmax.f32 %v635, %v636
  %v638 = vsel %vm105, %v565, -inf
  %v639 = vmax.f32 %v637, %v638
  %v640 = vsel %vm105, %v566, -inf
  %v641 = vmax.f32 %v639, %v640
  %v642 = vsel %vm105, %v567, -inf
  %v643 = vmax.f32 %v641, %v642
  %v644 = vsel %vm105, %v568, -inf
  %v645 = vmax.f32 %v643, %v644
  %v646 = vsel %vm105, %v569, -inf
  %v647 = vmax.f32 %v645, %v646
  %v648 = vsel %vm105, %v570, -inf
  %v649 = vsel %vm105, %v571, -inf
  %v650 = vmax.f32 %v648, %v649
  %v651 = vsel %vm105, %v572, -inf
  %v652 = vmax.f32 %v650, %v651
  %v653 = vsel %vm105, %v573, -inf
  %v654 = vmax.f32 %v652, %v653
  %v655 = vsel %vm105, %v574, -inf
  %v656 = vmax.f32 %v654, %v655
  %v657 = vsel %vm105, %v575, -inf
  %v658 = vmax.f32 %v656, %v657
  %v659 = vsel %vm105, %v576, -inf
  %v660 = vmax.f32 %v658, %v659
  %v661 = vsel %vm105, %v577, -inf
  %v662 = vmax.f32 %v660, %v661
  %v663 = vsel %vm105, %v578, -inf
  %v664 = vsel %vm105, %v579, -inf
  %v665 = vmax.f32 %v663, %v664
  %v666 = vsel %vm105, %v580, -inf
  %v667 = vmax.f32 %v665, %v666
  %v668 = vsel %vm105, %v581, -inf
  %v669 = vmax.f32 %v667, %v668
  %v670 = vsel %vm105, %v582, -inf
  %v671 = vmax.f32 %v669, %v670
  %v672 = vsel %vm105, %v583, -inf
  %v673 = vmax.f32 %v671, %v672
  %v674 = vsel %vm105, %v584, -inf
  %v675 = vmax.f32 %v673, %v674
  %v676 = vsel %vm105, %v585, -inf
  %v677 = vmax.f32 %v675, %v676
  %v678 = vsel %vm105, %v586, -inf
  %v679 = vsel %vm105, %v587, -inf
  %v680 = vmax.f32 %v678, %v679
  %v681 = vsel %vm105, %v588, -inf
  %v682 = vmax.f32 %v680, %v681
  %v683 = vsel %vm105, %v589, -inf
  %v684 = vmax.f32 %v682, %v683
  %v685 = vsel %vm105, %v590, -inf
  %v686 = vmax.f32 %v684, %v685
  %v687 = vsel %vm105, %v591, -inf
  %v688 = vmax.f32 %v686, %v687
  %v689 = vsel %vm105, %v592, -inf
  %v690 = vmax.f32 %v688, %v689
  %v691 = vsel %vm105, %v593, -inf
  %v692 = vmax.f32 %v690, %v691
  %v693 = vsel %vm105, %v594, -inf
  %v694 = vsel %vm105, %v595, -inf
  %v695 = vmax.f32 %v693, %v694
  %v696 = vsel %vm105, %v596, -inf
  %v697 = vmax.f32 %v695, %v696
  %v698 = vsel %vm105, %v597, -inf
  %v699 = vmax.f32 %v697, %v698
  %v700 = vsel %vm105, %v598, -inf
  %v701 = vmax.f32 %v699, %v700
  %v702 = vsel %vm105, %v599, -inf
  %v703 = vmax.f32 %v701, %v702
  %v704 = vsel %vm105, %v600, -inf
  %v705 = vmax.f32 %v703, %v704
  %v706 = vsel %vm105, %v601, -inf
  %v707 = vmax.f32 %v705, %v706
  %v708 = vsel %vm105, %v602, -inf
  %v709 = vsel %vm105, %v603, -inf
  %v710 = vmax.f32 %v708, %v709
  %v711 = vsel %vm105, %v604, -inf
  %v712 = vmax.f32 %v710, %v711
  %v713 = vsel %vm105, %v605, -inf
  %v714 = vmax.f32 %v712, %v713
  %v715 = vsel %vm105, %v606, -inf
  %v716 = vmax.f32 %v714, %v715
  %v717 = vsel %vm105, %v607, -inf
  %v718 = vmax.f32 %v716, %v717
  %v719 = vsel %vm105, %v608, -inf
  %v720 = vmax.f32 %v718, %v719
  %v721 = vsel %vm105, %v609, -inf
  %v722 = vmax.f32 %v720, %v721
  %v723 = vsel %vm105, %v610, -inf
  %v724 = vsel %vm105, %v611, -inf
  %v725 = vmax.f32 %v723, %v724
  %v726 = vsel %vm105, %v612, -inf
  %v727 = vmax.f32 %v725, %v726
  %v728 = vsel %vm105, %v613, -inf
  %v729 = vmax.f32 %v727, %v728
  %v730 = vsel %vm105, %v614, -inf
  %v731 = vmax.f32 %v729, %v730
  %v732 = vsel %vm105, %v615, -inf
  %v733 = vmax.f32 %v731, %v732
  %v734 = vsel %vm105, %v616, -inf
  %v735 = vmax.f32 %v733, %v734
  %v736 = vsel %vm105, %v617, -inf
  %v737 = vmax.f32 %v735, %v736
  %v738 = vsub.f32 %v554, %v632
  %v739 = vsub.f32 %v555, %v632
  %v740 = vsub.f32 %v556, %v632
  %v741 = vsub.f32 %v557, %v632
  %v742 = vsub.f32 %v558, %v632
  %v743 = vsub.f32 %v559, %v632
  %v744 = vsub.f32 %v560, %v632
  %v745 = vsub.f32 %v561, %v632
  %v746 = vsub.f32 %v562, %v647
  %v747 = vsub.f32 %v563, %v647
  %v748 = vsub.f32 %v564, %v647
  %v749 = vsub.f32 %v565, %v647
  %v750 = vsub.f32 %v566, %v647
  %v751 = vsub.f32 %v567, %v647
  %v752 = vsub.f32 %v568, %v647
  %v753 = vsub.f32 %v569, %v647
  %v754 = vsub.f32 %v570, %v662
  %v755 = vsub.f32 %v571, %v662
  %v756 = vsub.f32 %v572, %v662
  %v757 = vsub.f32 %v573, %v662
  %v758 = vsub.f32 %v574, %v662
  %v759 = vsub.f32 %v575, %v662
  %v760 = vsub.f32 %v576, %v662
  %v761 = vsub.f32 %v577, %v662
  %v762 = vsub.f32 %v578, %v677
  %v763 = vsub.f32 %v579, %v677
  %v764 = vsub.f32 %v580, %v677
  %v765 = vsub.f32 %v581, %v677
  %v766 = vsub.f32 %v582, %v677
  %v767 = vsub.f32 %v583, %v677
  %v768 = vsub.f32 %v584, %v677
  %v769 = vsub.f32 %v585, %v677
  %v770 = vsub.f32 %v586, %v692
  %v771 = vsub.f32 %v587, %v692
  %v772 = vsub.f32 %v588, %v692
  %v773 = vsub.f32 %v589, %v692
  %v774 = vsub.f32 %v590, %v692
  %v775 = vsub.f32 %v591, %v692
  %v776 = vsub.f32 %v592, %v692
  %v777 = vsub.f32 %v593, %v692
  %v778 = vsub.f32 %v594, %v707
  %v779 = vsub.f32 %v595, %v707
  %v780 = vsub.f32 %v596, %v707
  %v781 = vsub.f32 %v597, %v707
  %v782 = vsub.f32 %v598, %v707
  %v783 = vsub.f32 %v599, %v707
  %v784 = vsub.f32 %v600, %v707
  %v785 = vsub.f32 %v601, %v707
  %v786 = vsub.f32 %v602, %v722
  %v787 = vsub.f32 %v603, %v722
  %v788 = vsub.f32 %v604, %v722
  %v789 = vsub.f32 %v605, %v722
  %v790 = vsub.f32 %v606, %v722
  %v791 = vsub.f32 %v607, %v722
  %v792 = vsub.f32 %v608, %v722
  %v793 = vsub.f32 %v609, %v722
  %v794 = vsub.f32 %v610, %v737
  %v795 = vsub.f32 %v611, %v737
  %v796 = vsub.f32 %v612, %v737
  %v797 = vsub.f32 %v613, %v737
  %v798 = vsub.f32 %v614, %v737
  %v799 = vsub.f32 %v615, %v737
  %v800 = vsub.f32 %v616, %v737
  %v801 = vsub.f32 %v617, %v737
  %v802 = vmul.f32 %v738, 1.442695
  %v803 = vpow.pop %v802
  %v804 = vmul.f32 %v739, 1.442695
  %v805 = vpow.pop %v804
  %v806 = vmul.f32 %v740, 1.442695
  %v807 = vpow.pop %v806
  %v808 = vmul.f32 %v741, 1.442695
  %v809 = vpow.pop %v808
  %v810 = vmul.f32 %v742, 1.442695
  %v811 = vpow.pop %v810
  %v812 = vmul.f32 %v743, 1.442695
  %v813 = vpow.pop %v812
  %v814 = vmul.f32 %v744, 1.442695
  %v815 = vpow.pop %v814
  %v816 = vmul.f32 %v745, 1.442695
  %v817 = vpow.pop %v816
  %v818 = vmul.f32 %v746, 1.442695
  %v819 = vpow.pop %v818
  %v820 = vmul.f32 %v747, 1.442695
  %v821 = vpow.pop %v820
  %v822 = vmul.f32 %v748, 1.442695
  %v823 = vpow.pop %v822
  %v824 = vmul.f32 %v749, 1.442695
  %v825 = vpow.pop %v824
  %v826 = vmul.f32 %v750, 1.442695
  %v827 = vpow.pop %v826
  %v828 = vmul.f32 %v751, 1.442695
  %v829 = vpow.pop %v828
  %v830 = vmul.f32 %v752, 1.442695
  %v831 = vpow.pop %v830
  %v832 = vmul.f32 %v753, 1.442695
  %v833 = vpow.pop %v832
  %v834 = vmul.f32 %v754, 1.442695
  %v835 = vpow.pop %v834
  %v836 = vmul.f32 %v755, 1.442695
  %v837 = vpow.pop %v836
  %v838 = vmul.f32 %v756, 1.442695
  %v839 = vpow.pop %v838
  %v840 = vmul.f32 %v757, 1.442695
  %v841 = vpow.pop %v840
  %v842 = vmul.f32 %v758, 1.442695
  %v843 = vpow.pop %v842
  %v844 = vmul.f32 %v759, 1.442695
  %v845 = vpow.pop %v844
  %v846 = vmul.f32 %v760, 1.442695
  %v847 = vpow.pop %v846
  %v848 = vmul.f32 %v761, 1.442695
  %v849 = vpow.pop %v848
  %v850 = vmul.f32 %v762, 1.442695
  %v851 = vpow.pop %v850
  %v852 = vmul.f32 %v763, 1.442695
  %v853 = vpow.pop %v852
  %v854 = vmul.f32 %v764, 1.442695
  %v855 = vpow.pop %v854
  %v856 = vmul.f32 %v765, 1.442695
  %v857 = vpow.pop %v856
  %v858 = vmul.f32 %v766, 1.442695
  %v859 = vpow.pop %v858
  %v860 = vmul.f32 %v767, 1.442695
  %v861 = vpow.pop %v860
  %v862 = vmul.f32 %v768, 1.442695
  %v863 = vpow.pop %v862
  %v864 = vmul.f32 %v769, 1.442695
  %v865 = vpow.pop %v864
  %v866 = vmul.f32 %v770, 1.442695
  %v867 = vpow.pop %v866
  %v868 = vmul.f32 %v771, 1.442695
  %v869 = vpow.pop %v868
  %v870 = vmul.f32 %v772, 1.442695
  %v871 = vpow.pop %v870
  %v872 = vmul.f32 %v773, 1.442695
  %v873 = vpow.pop %v872
  %v874 = vmul.f32 %v774, 1.442695
  %v875 = vpow.pop %v874
  %v876 = vmul.f32 %v775, 1.442695
  %v877 = vpow.pop %v876
  %v878 = vmul.f32 %v776, 1.442695
  %v879 = vpow.pop %v878
  %v880 = vmul.f32 %v777, 1.442695
  %v881 = vpow.pop %v880
  %v882 = vmul.f32 %v778, 1.442695
  %v883 = vpow.pop %v882
  %v884 = vmul.f32 %v779, 1.442695
  %v885 = vpow.pop %v884
  %v886 = vmul.f32 %v780, 1.442695
  %v887 = vpow.pop %v886
  %v888 = vmul.f32 %v781, 1.442695
  %v889 = vpow.pop %v888
  %v890 = vmul.f32 %v782, 1.442695
  %v891 = vpow.pop %v890
  %v892 = vmul.f32 %v783, 1.442695
  %v893 = vpow.pop %v892
  %v894 = vmul.f32 %v784, 1.442695
  %v895 = vpow.pop %v894
  %v896 = vmul.f32 %v785, 1.442695
  %v897 = vpow.pop %v896
  %v898 = vmul.f32 %v786, 1.442695
  %v899 = vpow.pop %v898
  %v900 = vmul.f32 %v787, 1.442695
  %v901 = vpow.pop %v900
  %v902 = vmul.f32 %v788, 1.442695
  %v903 = vpow.pop %v902
  %v904 = vmul.f32 %v789, 1.442695
  %v905 = vpow.pop %v904
  %v906 = vmul.f32 %v790, 1.442695
  %v907 = vpow.pop %v906
  %v908 = vmul.f32 %v791, 1.442695
  %v909 = vpow.pop %v908
  %v910 = vmul.f32 %v792, 1.442695
  %v911 = vpow.pop %v910
  %v912 = vmul.f32 %v793, 1.442695
  %v913 = vpow.pop %v912
  %v914 = vmul.f32 %v794, 1.442695
  %v915 = vpow.pop %v914
  %v916 = vmul.f32 %v795, 1.442695
  %v917 = vpow.pop %v916
  %v918 = vmul.f32 %v796, 1.442695
  %v919 = vpow.pop %v918
  %v920 = vmul.f32 %v797, 1.442695
  %v921 = vpow.pop %v920
  %v922 = vmul.f32 %v798, 1.442695
  %v923 = vpow.pop %v922
  %v924 = vmul.f32 %v799, 1.442695
  %v925 = vpow.pop %v924
  %v926 = vmul.f32 %v800, 1.442695
  %v927 = vpow.pop %v926
  %v928 = vmul.f32 %v801, 1.442695
  %v929 = vpow.pop %v928
  %v930 = vsel %vm105, %v803, 0.0
  %v931 = vsel %vm105, %v805, 0.0
  %v932 = vadd.f32 %v930, %v931
  %v933 = vsel %vm105, %v807, 0.0
  %v934 = vadd.f32 %v932, %v933
  %v935 = vsel %vm105, %v809, 0.0
  %v936 = vadd.f32 %v934, %v935
  %v937 = vsel %vm105, %v811, 0.0
  %v938 = vadd.f32 %v936, %v937
  %v939 = vsel %vm105, %v813, 0.0
  %v940 = vadd.f32 %v938, %v939
  %v941 = vsel %vm105, %v815, 0.0
  %v942 = vadd.f32 %v940, %v941
  %v943 = vsel %vm105, %v817, 0.0
  %v944 = vadd.f32 %v942, %v943
  %v945 = vsel %vm105, %v819, 0.0
  %v946 = vsel %vm105, %v821, 0.0
  %v947 = vadd.f32 %v945, %v946
  %v948 = vsel %vm105, %v823, 0.0
  %v949 = vadd.f32 %v947, %v948
  %v950 = vsel %vm105, %v825, 0.0
  %v951 = vadd.f32 %v949, %v950
  %v952 = vsel %vm105, %v827, 0.0
  %v953 = vadd.f32 %v951, %v952
  %v954 = vsel %vm105, %v829, 0.0
  %v955 = vadd.f32 %v953, %v954
  %v956 = vsel %vm105, %v831, 0.0
  %v957 = vadd.f32 %v955, %v956
  %v958 = vsel %vm105, %v833, 0.0
  %v959 = vadd.f32 %v957, %v958
  %v960 = vsel %vm105, %v835, 0.0
  %v961 = vsel %vm105, %v837, 0.0
  %v962 = vadd.f32 %v960, %v961
  %v963 = vsel %vm105, %v839, 0.0
  %v964 = vadd.f32 %v962, %v963
  %v965 = vsel %vm105, %v841, 0.0
  %v966 = vadd.f32 %v964, %v965
  %v967 = vsel %vm105, %v843, 0.0
  %v968 = vadd.f32 %v966, %v967
  %v969 = vsel %vm105, %v845, 0.0
  %v970 = vadd.f32 %v968, %v969
  %v971 = vsel %vm105, %v847, 0.0
  %v972 = vadd.f32 %v970, %v971
  %v973 = vsel %vm105, %v849, 0.0
  %v974 = vadd.f32 %v972, %v973
  %v975 = vsel %vm105, %v851, 0.0
  %v976 = vsel %vm105, %v853, 0.0
  %v977 = vadd.f32 %v975, %v976
  %v978 = vsel %vm105, %v855, 0.0
  %v979 = vadd.f32 %v977, %v978
  %v980 = vsel %vm105, %v857, 0.0
  %v981 = vadd.f32 %v979, %v980
  %v982 = vsel %vm105, %v859, 0.0
  %v983 = vadd.f32 %v981, %v982
  %v984 = vsel %vm105, %v861, 0.0
  %v985 = vadd.f32 %v983, %v984
  %v986 = vsel %vm105, %v863, 0.0
  %v987 = vadd.f32 %v985, %v986
  %v988 = vsel %vm105, %v865, 0.0
  %v989 = vadd.f32 %v987, %v988
  %v990 = vsel %vm105, %v867, 0.0
  %v991 = vsel %vm105, %v869, 0.0
  %v992 = vadd.f32 %v990, %v991
  %v993 = vsel %vm105, %v871, 0.0
  %v994 = vadd.f32 %v992, %v993
  %v995 = vsel %vm105, %v873, 0.0
  %v996 = vadd.f32 %v994, %v995
  %v997 = vsel %vm105, %v875, 0.0
  %v998 = vadd.f32 %v996, %v997
  %v999 = vsel %vm105, %v877, 0.0
  %v1000 = vadd.f32 %v998, %v999
  %v1001 = vsel %vm105, %v879, 0.0
  %v1002 = vadd.f32 %v1000, %v1001
  %v1003 = vsel %vm105, %v881, 0.0
  %v1004 = vadd.f32 %v1002, %v1003
  %v1005 = vsel %vm105, %v883, 0.0
  %v1006 = vsel %vm105, %v885, 0.0
  %v1007 = vadd.f32 %v1005, %v1006
  %v1008 = vsel %vm105, %v887, 0.0
  %v1009 = vadd.f32 %v1007, %v1008
  %v1010 = vsel %vm105, %v889, 0.0
  %v1011 = vadd.f32 %v1009, %v1010
  %v1012 = vsel %vm105, %v891, 0.0
  %v1013 = vadd.f32 %v1011, %v1012
  %v1014 = vsel %vm105, %v893, 0.0
  %v1015 = vadd.f32 %v1013, %v1014
  %v1016 = vsel %vm105, %v895, 0.0
  %v1017 = vadd.f32 %v1015, %v1016
  %v1018 = vsel %vm105, %v897, 0.0
  %v1019 = vadd.f32 %v1017, %v1018
  %v1020 = vsel %vm105, %v899, 0.0
  %v1021 = vsel %vm105, %v901, 0.0
  %v1022 = vadd.f32 %v1020, %v1021
  %v1023 = vsel %vm105, %v903, 0.0
  %v1024 = vadd.f32 %v1022, %v1023
  %v1025 = vsel %vm105, %v905, 0.0
  %v1026 = vadd.f32 %v1024, %v1025
  %v1027 = vsel %vm105, %v907, 0.0
  %v1028 = vadd.f32 %v1026, %v1027
  %v1029 = vsel %vm105, %v909, 0.0
  %v1030 = vadd.f32 %v1028, %v1029
  %v1031 = vsel %vm105, %v911, 0.0
  %v1032 = vadd.f32 %v1030, %v1031
  %v1033 = vsel %vm105, %v913, 0.0
  %v1034 = vadd.f32 %v1032, %v1033
  %v1035 = vsel %vm105, %v915, 0.0
  %v1036 = vsel %vm105, %v917, 0.0
  %v1037 = vadd.f32 %v1035, %v1036
  %v1038 = vsel %vm105, %v919, 0.0
  %v1039 = vadd.f32 %v1037, %v1038
  %v1040 = vsel %vm105, %v921, 0.0
  %v1041 = vadd.f32 %v1039, %v1040
  %v1042 = vsel %vm105, %v923, 0.0
  %v1043 = vadd.f32 %v1041, %v1042
  %v1044 = vsel %vm105, %v925, 0.0
  %v1045 = vadd.f32 %v1043, %v1044
  %v1046 = vsel %vm105, %v927, 0.0
  %v1047 = vadd.f32 %v1045, %v1046
  %v1048 = vsel %vm105, %v929, 0.0
  %v1049 = vadd.f32 %v1047, %v1048
  %v1050 = vrcp.pop %v944
  %v1051 = vmul.f32 1.0, %v1050
  %v1052 = vrcp.pop %v959
  %v1053 = vmul.f32 1.0, %v1052
  %v1054 = vrcp.pop %v974
  %v1055 = vmul.f32 1.0, %v1054
  %v1056 = vrcp.pop %v989
  %v1057 = vmul.f32 1.0, %v1056
  %v1058 = vrcp.pop %v1004
  %v1059 = vmul.f32 1.0, %v1058
  %v1060 = vrcp.pop %v1019
  %v1061 = vmul.f32 1.0, %v1060
  %v1062 = vrcp.pop %v1034
  %v1063 = vmul.f32 1.0, %v1062
  %v1064 = vrcp.pop %v1049
  %v1065 = vmul.f32 1.0, %v1064
  %v1066 = vmul.f32 %v803, %v1051
  %v1067 = vmul.f32 %v805, %v1051
  %v1068 = vmul.f32 %v807, %v1051
  %v1069 = vmul.f32 %v809, %v1051
  %v1070 = vmul.f32 %v811, %v1051
  %v1071 = vmul.f32 %v813, %v1051
  %v1072 = vmul.f32 %v815, %v1051
  %v1073 = vmul.f32 %v817, %v1051
  %v1074 = vmul.f32 %v819, %v1053
  %v1075 = vmul.f32 %v821, %v1053
  %v1076 = vmul.f32 %v823, %v1053
  %v1077 = vmul.f32 %v825, %v1053
  %v1078 = vmul.f32 %v827, %v1053
  %v1079 = vmul.f32 %v829, %v1053
  %v1080 = vmul.f32 %v831, %v1053
  %v1081 = vmul.f32 %v833, %v1053
  %v1082 = vmul.f32 %v835, %v1055
  %v1083 = vmul.f32 %v837, %v1055
  %v1084 = vmul.f32 %v839, %v1055
  %v1085 = vmul.f32 %v841, %v1055
  %v1086 = vmul.f32 %v843, %v1055
  %v1087 = vmul.f32 %v845, %v1055
  %v1088 = vmul.f32 %v847, %v1055
  %v1089 = vmul.f32 %v849, %v1055
  %v1090 = vmul.f32 %v851, %v1057
  %v1091 = vmul.f32 %v853, %v1057
  %v1092 = vmul.f32 %v855, %v1057
  %v1093 = vmul.f32 %v857, %v1057
  %v1094 = vmul.f32 %v859, %v1057
  %v1095 = vmul.f32 %v861, %v1057
  %v1096 = vmul.f32 %v863, %v1057
  %v1097 = vmul.f32 %v865, %v1057
  %v1098 = vmul.f32 %v867, %v1059
  %v1099 = vmul.f32 %v869, %v1059
  %v1100 = vmul.f32 %v871, %v1059
  %v1101 = vmul.f32 %v873, %v1059
  %v1102 = vmul.f32 %v875, %v1059
  %v1103 = vmul.f32 %v877, %v1059
  %v1104 = vmul.f32 %v879, %v1059
  %v1105 = vmul.f32 %v881, %v1059
  %v1106 = vmul.f32 %v883, %v1061
  %v1107 = vmul.f32 %v885, %v1061
  %v1108 = vmul.f32 %v887, %v1061
  %v1109 = vmul.f32 %v889, %v1061
  %v1110 = vmul.f32 %v891, %v1061
  %v1111 = vmul.f32 %v893, %v1061
  %v1112 = vmul.f32 %v895, %v1061
  %v1113 = vmul.f32 %v897, %v1061
  %v1114 = vmul.f32 %v899, %v1063
  %v1115 = vmul.f32 %v901, %v1063
  %v1116 = vmul.f32 %v903, %v1063
  %v1117 = vmul.f32 %v905, %v1063
  %v1118 = vmul.f32 %v907, %v1063
  %v1119 = vmul.f32 %v909, %v1063
  %v1120 = vmul.f32 %v911, %v1063
  %v1121 = vmul.f32 %v913, %v1063
  %v1122 = vmul.f32 %v915, %v1065
  %v1123 = vmul.f32 %v917, %v1065
  %v1124 = vmul.f32 %v919, %v1065
  %v1125 = vmul.f32 %v921, %v1065
  %v1126 = vmul.f32 %v923, %v1065
  %v1127 = vmul.f32 %v925, %v1065
  %v1128 = vmul.f32 %v927, %v1065
  %v1129 = vmul.f32 %v929, %v1065
  %v1130 = vld [vmem:[%s3] sm:$0x1]
  %v1131 = vld [vmem:[%s3 + $0x1] sm:$0x1]
  %v1132 = vld [vmem:[%s3 + $0x2] sm:$0x1]
  %v1133 = vld [vmem:[%s3 + $0x3] sm:$0x1]
  %v1134 = vld [vmem:[%s3 + $0x4] sm:$0x1]
  %v1135 = vld [vmem:[%s3 + $0x5] sm:$0x1]
  %v1136 = vld [vmem:[%s3 + $0x6] sm:$0x1]
  %v1137 = vld [vmem:[%s3 + $0x7] sm:$0x1]
  %v1138 = vld [vmem:[%s3 + $0x8] sm:$0x1]
  %v1139 = vld [vmem:[%s3 + $0x9] sm:$0x1]
  %v1140 = vld [vmem:[%s3 + $0xa] sm:$0x1]
  %v1141 = vld [vmem:[%s3 + $0xb] sm:$0x1]
  %v1142 = vld [vmem:[%s3 + $0xc] sm:$0x1]
  %v1143 = vld [vmem:[%s3 + $0xd] sm:$0x1]
  %v1144 = vld [vmem:[%s3 + $0xe] sm:$0x1]
  %v1145 = vld [vmem:[%s3 + $0xf] sm:$0x1]
  %v1146 = vld [vmem:[%s3 + $0x10] sm:$0x1]
  %v1147 = vld [vmem:[%s3 + $0x11] sm:$0x1]
  %v1148 = vld [vmem:[%s3 + $0x12] sm:$0x1]
  %v1149 = vld [vmem:[%s3 + $0x13] sm:$0x1]
  %v1150 = vld [vmem:[%s3 + $0x14] sm:$0x1]
  %v1151 = vld [vmem:[%s3 + $0x15] sm:$0x1]
  %v1152 = vld [vmem:[%s3 + $0x16] sm:$0x1]
  %v1153 = vld [vmem:[%s3 + $0x17] sm:$0x1]
  %v1154 = vld [vmem:[%s3 + $0x18] sm:$0x1]
  %v1155 = vld [vmem:[%s3 + $0x19] sm:$0x1]
  %v1156 = vld [vmem:[%s3 + $0x1a] sm:$0x1]
  %v1157 = vld [vmem:[%s3 + $0x1b] sm:$0x1]
  %v1158 = vld [vmem:[%s3 + $0x1c] sm:$0x1]
  %v1159 = vld [vmem:[%s3 + $0x1d] sm:$0x1]
  %v1160 = vld [vmem:[%s3 + $0x1e] sm:$0x1]
  %v1161 = vld [vmem:[%s3 + $0x1f] sm:$0x1]
  %v1162 = vld [vmem:[%s3 + $0x20] sm:$0x1]
  %v1163 = vld [vmem:[%s3 + $0x21] sm:$0x1]
  %v1164 = vld [vmem:[%s3 + $0x22] sm:$0x1]
  %v1165 = vld [vmem:[%s3 + $0x23] sm:$0x1]
  %v1166 = vld [vmem:[%s3 + $0x24] sm:$0x1]
  %v1167 = vld [vmem:[%s3 + $0x25] sm:$0x1]
  %v1168 = vld [vmem:[%s3 + $0x26] sm:$0x1]
  %v1169 = vld [vmem:[%s3 + $0x27] sm:$0x1]
  %v1170 = vld [vmem:[%s3 + $0x28] sm:$0x1]
  %v1171 = vld [vmem:[%s3 + $0x29] sm:$0x1]
  %v1172 = vld [vmem:[%s3 + $0x2a] sm:$0x1]
  %v1173 = vld [vmem:[%s3 + $0x2b] sm:$0x1]
  %v1174 = vld [vmem:[%s3 + $0x2c] sm:$0x1]
  %v1175 = vld [vmem:[%s3 + $0x2d] sm:$0x1]
  %v1176 = vld [vmem:[%s3 + $0x2e] sm:$0x1]
  %v1177 = vld [vmem:[%s3 + $0x2f] sm:$0x1]
  %v1178 = vld [vmem:[%s3 + $0x30] sm:$0x1]
  %v1179 = vld [vmem:[%s3 + $0x31] sm:$0x1]
  %v1180 = vld [vmem:[%s3 + $0x32] sm:$0x1]
  %v1181 = vld [vmem:[%s3 + $0x33] sm:$0x1]
  %v1182 = vld [vmem:[%s3 + $0x34] sm:$0x1]
  %v1183 = vld [vmem:[%s3 + $0x35] sm:$0x1]
  %v1184 = vld [vmem:[%s3 + $0x36] sm:$0x1]
  %v1185 = vld [vmem:[%s3 + $0x37] sm:$0x1]
  %v1186 = vld [vmem:[%s3 + $0x38] sm:$0x1]
  %v1187 = vld [vmem:[%s3 + $0x39] sm:$0x1]
  %v1188 = vld [vmem:[%s3 + $0x3a] sm:$0x1]
  %v1189 = vld [vmem:[%s3 + $0x3b] sm:$0x1]
  %v1190 = vld [vmem:[%s3 + $0x3c] sm:$0x1]
  %v1191 = vld [vmem:[%s3 + $0x3d] sm:$0x1]
  %v1192 = vld [vmem:[%s3 + $0x3e] sm:$0x1]
  %v1193 = vld [vmem:[%s3 + $0x3f] sm:$0x1]
  %vm1194 = vcmp.lt.u32.totalorder %v1130, 1288490188
  %vm1195 = vcmp.lt.u32.totalorder %v1131, 1288490188
  %vm1196 = vcmp.lt.u32.totalorder %v1132, 1288490188
  %vm1197 = vcmp.lt.u32.totalorder %v1133, 1288490188
  %vm1198 = vcmp.lt.u32.totalorder %v1134, 1288490188
  %vm1199 = vcmp.lt.u32.totalorder %v1135, 1288490188
  %vm1200 = vcmp.lt.u32.totalorder %v1136, 1288490188
  %vm1201 = vcmp.lt.u32.totalorder %v1137, 1288490188
  %vm1202 = vcmp.lt.u32.totalorder %v1138, 1288490188
  %vm1203 = vcmp.lt.u32.totalorder %v1139, 1288490188
  %vm1204 = vcmp.lt.u32.totalorder %v1140, 1288490188
  %vm1205 = vcmp.lt.u32.totalorder %v1141, 1288490188
  %vm1206 = vcmp.lt.u32.totalorder %v1142, 1288490188
  %vm1207 = vcmp.lt.u32.totalorder %v1143, 1288490188
  %vm1208 = vcmp.lt.u32.totalorder %v1144, 1288490188
  %vm1209 = vcmp.lt.u32.totalorder %v1145, 1288490188
  %vm1210 = vcmp.lt.u32.totalorder %v1146, 1288490188
  %vm1211 = vcmp.lt.u32.totalorder %v1147, 1288490188
  %vm1212 = vcmp.lt.u32.totalorder %v1148, 1288490188
  %vm1213 = vcmp.lt.u32.totalorder %v1149, 1288490188
  %vm1214 = vcmp.lt.u32.totalorder %v1150, 1288490188
  %vm1215 = vcmp.lt.u32.totalorder %v1151, 1288490188
  %vm1216 = vcmp.lt.u32.totalorder %v1152, 1288490188
  %vm1217 = vcmp.lt.u32.totalorder %v1153, 1288490188
  %vm1218 = vcmp.lt.u32.totalorder %v1154, 1288490188
  %vm1219 = vcmp.lt.u32.totalorder %v1155, 1288490188
  %vm1220 = vcmp.lt.u32.totalorder %v1156, 1288490188
  %vm1221 = vcmp.lt.u32.totalorder %v1157, 1288490188
  %vm1222 = vcmp.lt.u32.totalorder %v1158, 1288490188
  %vm1223 = vcmp.lt.u32.totalorder %v1159, 1288490188
  %vm1224 = vcmp.lt.u32.totalorder %v1160, 1288490188
  %vm1225 = vcmp.lt.u32.totalorder %v1161, 1288490188
  %vm1226 = vcmp.lt.u32.totalorder %v1162, 1288490188
  %vm1227 = vcmp.lt.u32.totalorder %v1163, 1288490188
  %vm1228 = vcmp.lt.u32.totalorder %v1164, 1288490188
  %vm1229 = vcmp.lt.u32.totalorder %v1165, 1288490188
  %vm1230 = vcmp.lt.u32.totalorder %v1166, 1288490188
  %vm1231 = vcmp.lt.u32.totalorder %v1167, 1288490188
  %vm1232 = vcmp.lt.u32.totalorder %v1168, 1288490188
  %vm1233 = vcmp.lt.u32.totalorder %v1169, 1288490188
  %vm1234 = vcmp.lt.u32.totalorder %v1170, 1288490188
  %vm1235 = vcmp.lt.u32.totalorder %v1171, 1288490188
  %vm1236 = vcmp.lt.u32.totalorder %v1172, 1288490188
  %vm1237 = vcmp.lt.u32.totalorder %v1173, 1288490188
  %vm1238 = vcmp.lt.u32.totalorder %v1174, 1288490188
  %vm1239 = vcmp.lt.u32.totalorder %v1175, 1288490188
  %vm1240 = vcmp.lt.u32.totalorder %v1176, 1288490188
  %vm1241 = vcmp.lt.u32.totalorder %v1177, 1288490188
  %vm1242 = vcmp.lt.u32.totalorder %v1178, 1288490188
  %vm1243 = vcmp.lt.u32.totalorder %v1179, 1288490188
  %vm1244 = vcmp.lt.u32.totalorder %v1180, 1288490188
  %vm1245 = vcmp.lt.u32.totalorder %v1181, 1288490188
  %vm1246 = vcmp.lt.u32.totalorder %v1182, 1288490188
  %vm1247 = vcmp.lt.u32.totalorder %v1183, 1288490188
  %vm1248 = vcmp.lt.u32.totalorder %v1184, 1288490188
  %vm1249 = vcmp.lt.u32.totalorder %v1185, 1288490188
  %vm1250 = vcmp.lt.u32.totalorder %v1186, 1288490188
  %vm1251 = vcmp.lt.u32.totalorder %v1187, 1288490188
  %vm1252 = vcmp.lt.u32.totalorder %v1188, 1288490188
  %vm1253 = vcmp.lt.u32.totalorder %v1189, 1288490188
  %vm1254 = vcmp.lt.u32.totalorder %v1190, 1288490188
  %vm1255 = vcmp.lt.u32.totalorder %v1191, 1288490188
  %vm1256 = vcmp.lt.u32.totalorder %v1192, 1288490188
  %vm1257 = vcmp.lt.u32.totalorder %v1193, 1288490188
  %v1258 = vsel %vm1194, %v1066, 0.0
  %v1259 = vsel %vm1195, %v1067, 0.0
  %v1260 = vsel %vm1196, %v1068, 0.0
  %v1261 = vsel %vm1197, %v1069, 0.0
  %v1262 = vsel %vm1198, %v1070, 0.0
  %v1263 = vsel %vm1199, %v1071, 0.0
  %v1264 = vsel %vm1200, %v1072, 0.0
  %v1265 = vsel %vm1201, %v1073, 0.0
  %v1266 = vsel %vm1202, %v1074, 0.0
  %v1267 = vsel %vm1203, %v1075, 0.0
  %v1268 = vsel %vm1204, %v1076, 0.0
  %v1269 = vsel %vm1205, %v1077, 0.0
  %v1270 = vsel %vm1206, %v1078, 0.0
  %v1271 = vsel %vm1207, %v1079, 0.0
  %v1272 = vsel %vm1208, %v1080, 0.0
  %v1273 = vsel %vm1209, %v1081, 0.0
  %v1274 = vsel %vm1210, %v1082, 0.0
  %v1275 = vsel %vm1211, %v1083, 0.0
  %v1276 = vsel %vm1212, %v1084, 0.0
  %v1277 = vsel %vm1213, %v1085, 0.0
  %v1278 = vsel %vm1214, %v1086, 0.0
  %v1279 = vsel %vm1215, %v1087, 0.0
  %v1280 = vsel %vm1216, %v1088, 0.0
  %v1281 = vsel %vm1217, %v1089, 0.0
  %v1282 = vsel %vm1218, %v1090, 0.0
  %v1283 = vsel %vm1219, %v1091, 0.0
  %v1284 = vsel %vm1220, %v1092, 0.0
  %v1285 = vsel %vm1221, %v1093, 0.0
  %v1286 = vsel %vm1222, %v1094, 0.0
  %v1287 = vsel %vm1223, %v1095, 0.0
  %v1288 = vsel %vm1224, %v1096, 0.0
  %v1289 = vsel %vm1225, %v1097, 0.0
  %v1290 = vsel %vm1226, %v1098, 0.0
  %v1291 = vsel %vm1227, %v1099, 0.0
  %v1292 = vsel %vm1228, %v1100, 0.0
  %v1293 = vsel %vm1229, %v1101, 0.0
  %v1294 = vsel %vm1230, %v1102, 0.0
  %v1295 = vsel %vm1231, %v1103, 0.0
  %v1296 = vsel %vm1232, %v1104, 0.0
  %v1297 = vsel %vm1233, %v1105, 0.0
  %v1298 = vsel %vm1234, %v1106, 0.0
  %v1299 = vsel %vm1235, %v1107, 0.0
  %v1300 = vsel %vm1236, %v1108, 0.0
  %v1301 = vsel %vm1237, %v1109, 0.0
  %v1302 = vsel %vm1238, %v1110, 0.0
  %v1303 = vsel %vm1239, %v1111, 0.0
  %v1304 = vsel %vm1240, %v1112, 0.0
  %v1305 = vsel %vm1241, %v1113, 0.0
  %v1306 = vsel %vm1242, %v1114, 0.0
  %v1307 = vsel %vm1243, %v1115, 0.0
  %v1308 = vsel %vm1244, %v1116, 0.0
  %v1309 = vsel %vm1245, %v1117, 0.0
  %v1310 = vsel %vm1246, %v1118, 0.0
  %v1311 = vsel %vm1247, %v1119, 0.0
  %v1312 = vsel %vm1248, %v1120, 0.0
  %v1313 = vsel %vm1249, %v1121, 0.0
  %v1314 = vsel %vm1250, %v1122, 0.0
  %v1315 = vsel %vm1251, %v1123, 0.0
  %v1316 = vsel %vm1252, %v1124, 0.0
  %v1317 = vsel %vm1253, %v1125, 0.0
  %v1318 = vsel %vm1254, %v1126, 0.0
  %v1319 = vsel %vm1255, %v1127, 0.0
  %v1320 = vsel %vm1256, %v1128, 0.0
  %v1321 = vsel %vm1257, %v1129, 0.0
  %v1386 = vlaneseq
  %v1387 = vshrl.u32 %v1386, 7
  %v1388 = vsub.s32 0, %v1387
  %v1389 = vrot.slane %v1258, %v1388
  %v1390 = vlaneseq
  %v1391 = vshrl.u32 %v1390, 7
  %v1392 = vsub.s32 0, %v1391
  %v1393 = vrot.slane %v1259, %v1392
  %v1394 = vlaneseq
  %v1395 = vshrl.u32 %v1394, 7
  %v1396 = vsub.s32 0, %v1395
  %v1397 = vrot.slane %v1260, %v1396
  %v1398 = vlaneseq
  %v1399 = vshrl.u32 %v1398, 7
  %v1400 = vsub.s32 0, %v1399
  %v1401 = vrot.slane %v1261, %v1400
  %v1402 = vlaneseq
  %v1403 = vshrl.u32 %v1402, 7
  %v1404 = vsub.s32 0, %v1403
  %v1405 = vrot.slane %v1262, %v1404
  %v1406 = vlaneseq
  %v1407 = vshrl.u32 %v1406, 7
  %v1408 = vsub.s32 0, %v1407
  %v1409 = vrot.slane %v1263, %v1408
  %v1410 = vlaneseq
  %v1411 = vshrl.u32 %v1410, 7
  %v1412 = vsub.s32 0, %v1411
  %v1413 = vrot.slane %v1264, %v1412
  %v1414 = vlaneseq
  %v1415 = vshrl.u32 %v1414, 7
  %v1416 = vsub.s32 0, %v1415
  %v1417 = vrot.slane %v1265, %v1416
  %v1418 = vlaneseq
  %v1419 = vshrl.u32 %v1418, 7
  %v1420 = vsub.s32 0, %v1419
  %v1421 = vrot.slane %v1266, %v1420
  %v1422 = vlaneseq
  %v1423 = vshrl.u32 %v1422, 7
  %v1424 = vsub.s32 0, %v1423
  %v1425 = vrot.slane %v1267, %v1424
  %v1426 = vlaneseq
  %v1427 = vshrl.u32 %v1426, 7
  %v1428 = vsub.s32 0, %v1427
  %v1429 = vrot.slane %v1268, %v1428
  %v1430 = vlaneseq
  %v1431 = vshrl.u32 %v1430, 7
  %v1432 = vsub.s32 0, %v1431
  %v1433 = vrot.slane %v1269, %v1432
  %v1434 = vlaneseq
  %v1435 = vshrl.u32 %v1434, 7
  %v1436 = vsub.s32 0, %v1435
  %v1437 = vrot.slane %v1270, %v1436
  %v1438 = vlaneseq
  %v1439 = vshrl.u32 %v1438, 7
  %v1440 = vsub.s32 0, %v1439
  %v1441 = vrot.slane %v1271, %v1440
  %v1442 = vlaneseq
  %v1443 = vshrl.u32 %v1442, 7
  %v1444 = vsub.s32 0, %v1443
  %v1445 = vrot.slane %v1272, %v1444
  %v1446 = vlaneseq
  %v1447 = vshrl.u32 %v1446, 7
  %v1448 = vsub.s32 0, %v1447
  %v1449 = vrot.slane %v1273, %v1448
  %v1450 = vlaneseq
  %v1451 = vshrl.u32 %v1450, 7
  %v1452 = vsub.s32 0, %v1451
  %v1453 = vrot.slane %v1274, %v1452
  %v1454 = vlaneseq
  %v1455 = vshrl.u32 %v1454, 7
  %v1456 = vsub.s32 0, %v1455
  %v1457 = vrot.slane %v1275, %v1456
  %v1458 = vlaneseq
  %v1459 = vshrl.u32 %v1458, 7
  %v1460 = vsub.s32 0, %v1459
  %v1461 = vrot.slane %v1276, %v1460
  %v1462 = vlaneseq
  %v1463 = vshrl.u32 %v1462, 7
  %v1464 = vsub.s32 0, %v1463
  %v1465 = vrot.slane %v1277, %v1464
  %v1466 = vlaneseq
  %v1467 = vshrl.u32 %v1466, 7
  %v1468 = vsub.s32 0, %v1467
  %v1469 = vrot.slane %v1278, %v1468
  %v1470 = vlaneseq
  %v1471 = vshrl.u32 %v1470, 7
  %v1472 = vsub.s32 0, %v1471
  %v1473 = vrot.slane %v1279, %v1472
  %v1474 = vlaneseq
  %v1475 = vshrl.u32 %v1474, 7
  %v1476 = vsub.s32 0, %v1475
  %v1477 = vrot.slane %v1280, %v1476
  %v1478 = vlaneseq
  %v1479 = vshrl.u32 %v1478, 7
  %v1480 = vsub.s32 0, %v1479
  %v1481 = vrot.slane %v1281, %v1480
  %v1482 = vlaneseq
  %v1483 = vshrl.u32 %v1482, 7
  %v1484 = vsub.s32 0, %v1483
  %v1485 = vrot.slane %v1282, %v1484
  %v1486 = vlaneseq
  %v1487 = vshrl.u32 %v1486, 7
  %v1488 = vsub.s32 0, %v1487
  %v1489 = vrot.slane %v1283, %v1488
  %v1490 = vlaneseq
  %v1491 = vshrl.u32 %v1490, 7
  %v1492 = vsub.s32 0, %v1491
  %v1493 = vrot.slane %v1284, %v1492
  %v1494 = vlaneseq
  %v1495 = vshrl.u32 %v1494, 7
  %v1496 = vsub.s32 0, %v1495
  %v1497 = vrot.slane %v1285, %v1496
  %v1498 = vlaneseq
  %v1499 = vshrl.u32 %v1498, 7
  %v1500 = vsub.s32 0, %v1499
  %v1501 = vrot.slane %v1286, %v1500
  %v1502 = vlaneseq
  %v1503 = vshrl.u32 %v1502, 7
  %v1504 = vsub.s32 0, %v1503
  %v1505 = vrot.slane %v1287, %v1504
  %v1506 = vlaneseq
  %v1507 = vshrl.u32 %v1506, 7
  %v1508 = vsub.s32 0, %v1507
  %v1509 = vrot.slane %v1288, %v1508
  %v1510 = vlaneseq
  %v1511 = vshrl.u32 %v1510, 7
  %v1512 = vsub.s32 0, %v1511
  %v1513 = vrot.slane %v1289, %v1512
  %v1514 = vlaneseq
  %v1515 = vshrl.u32 %v1514, 7
  %v1516 = vsub.s32 0, %v1515
  %v1517 = vrot.slane %v1290, %v1516
  %v1518 = vlaneseq
  %v1519 = vshrl.u32 %v1518, 7
  %v1520 = vsub.s32 0, %v1519
  %v1521 = vrot.slane %v1291, %v1520
  %v1522 = vlaneseq
  %v1523 = vshrl.u32 %v1522, 7
  %v1524 = vsub.s32 0, %v1523
  %v1525 = vrot.slane %v1292, %v1524
  %v1526 = vlaneseq
  %v1527 = vshrl.u32 %v1526, 7
  %v1528 = vsub.s32 0, %v1527
  %v1529 = vrot.slane %v1293, %v1528
  %v1530 = vlaneseq
  %v1531 = vshrl.u32 %v1530, 7
  %v1532 = vsub.s32 0, %v1531
  %v1533 = vrot.slane %v1294, %v1532
  %v1534 = vlaneseq
  %v1535 = vshrl.u32 %v1534, 7
  %v1536 = vsub.s32 0, %v1535
  %v1537 = vrot.slane %v1295, %v1536
  %v1538 = vlaneseq
  %v1539 = vshrl.u32 %v1538, 7
  %v1540 = vsub.s32 0, %v1539
  %v1541 = vrot.slane %v1296, %v1540
  %v1542 = vlaneseq
  %v1543 = vshrl.u32 %v1542, 7
  %v1544 = vsub.s32 0, %v1543
  %v1545 = vrot.slane %v1297, %v1544
  %v1546 = vlaneseq
  %v1547 = vshrl.u32 %v1546, 7
  %v1548 = vsub.s32 0, %v1547
  %v1549 = vrot.slane %v1298, %v1548
  %v1550 = vlaneseq
  %v1551 = vshrl.u32 %v1550, 7
  %v1552 = vsub.s32 0, %v1551
  %v1553 = vrot.slane %v1299, %v1552
  %v1554 = vlaneseq
  %v1555 = vshrl.u32 %v1554, 7
  %v1556 = vsub.s32 0, %v1555
  %v1557 = vrot.slane %v1300, %v1556
  %v1558 = vlaneseq
  %v1559 = vshrl.u32 %v1558, 7
  %v1560 = vsub.s32 0, %v1559
  %v1561 = vrot.slane %v1301, %v1560
  %v1562 = vlaneseq
  %v1563 = vshrl.u32 %v1562, 7
  %v1564 = vsub.s32 0, %v1563
  %v1565 = vrot.slane %v1302, %v1564
  %v1566 = vlaneseq
  %v1567 = vshrl.u32 %v1566, 7
  %v1568 = vsub.s32 0, %v1567
  %v1569 = vrot.slane %v1303, %v1568
  %v1570 = vlaneseq
  %v1571 = vshrl.u32 %v1570, 7
  %v1572 = vsub.s32 0, %v1571
  %v1573 = vrot.slane %v1304, %v1572
  %v1574 = vlaneseq
  %v1575 = vshrl.u32 %v1574, 7
  %v1576 = vsub.s32 0, %v1575
  %v1577 = vrot.slane %v1305, %v1576
  %v1578 = vlaneseq
  %v1579 = vshrl.u32 %v1578, 7
  %v1580 = vsub.s32 0, %v1579
  %v1581 = vrot.slane %v1306, %v1580
  %v1582 = vlaneseq
  %v1583 = vshrl.u32 %v1582, 7
  %v1584 = vsub.s32 0, %v1583
  %v1585 = vrot.slane %v1307, %v1584
  %v1586 = vlaneseq
  %v1587 = vshrl.u32 %v1586, 7
  %v1588 = vsub.s32 0, %v1587
  %v1589 = vrot.slane %v1308, %v1588
  %v1590 = vlaneseq
  %v1591 = vshrl.u32 %v1590, 7
  %v1592 = vsub.s32 0, %v1591
  %v1593 = vrot.slane %v1309, %v1592
  %v1594 = vlaneseq
  %v1595 = vshrl.u32 %v1594, 7
  %v1596 = vsub.s32 0, %v1595
  %v1597 = vrot.slane %v1310, %v1596
  %v1598 = vlaneseq
  %v1599 = vshrl.u32 %v1598, 7
  %v1600 = vsub.s32 0, %v1599
  %v1601 = vrot.slane %v1311, %v1600
  %v1602 = vlaneseq
  %v1603 = vshrl.u32 %v1602, 7
  %v1604 = vsub.s32 0, %v1603
  %v1605 = vrot.slane %v1312, %v1604
  %v1606 = vlaneseq
  %v1607 = vshrl.u32 %v1606, 7
  %v1608 = vsub.s32 0, %v1607
  %v1609 = vrot.slane %v1313, %v1608
  %v1610 = vlaneseq
  %v1611 = vshrl.u32 %v1610, 7
  %v1612 = vsub.s32 0, %v1611
  %v1613 = vrot.slane %v1314, %v1612
  %v1614 = vlaneseq
  %v1615 = vshrl.u32 %v1614, 7
  %v1616 = vsub.s32 0, %v1615
  %v1617 = vrot.slane %v1315, %v1616
  %v1618 = vlaneseq
  %v1619 = vshrl.u32 %v1618, 7
  %v1620 = vsub.s32 0, %v1619
  %v1621 = vrot.slane %v1316, %v1620
  %v1622 = vlaneseq
  %v1623 = vshrl.u32 %v1622, 7
  %v1624 = vsub.s32 0, %v1623
  %v1625 = vrot.slane %v1317, %v1624
  %v1626 = vlaneseq
  %v1627 = vshrl.u32 %v1626, 7
  %v1628 = vsub.s32 0, %v1627
  %v1629 = vrot.slane %v1318, %v1628
  %v1630 = vlaneseq
  %v1631 = vshrl.u32 %v1630, 7
  %v1632 = vsub.s32 0, %v1631
  %v1633 = vrot.slane %v1319, %v1632
  %v1634 = vlaneseq
  %v1635 = vshrl.u32 %v1634, 7
  %v1636 = vsub.s32 0, %v1635
  %v1637 = vrot.slane %v1320, %v1636
  %v1638 = vlaneseq
  %v1639 = vshrl.u32 %v1638, 7
  %v1640 = vsub.s32 0, %v1639
  %v1641 = vrot.slane %v1321, %v1640
  %v1706 = vmul.f32 %v1389, %v33
  %v1707 = vmul.f32 %v1393, %v34
  %v1708 = vmul.f32 %v1397, %v35
  %v1709 = vmul.f32 %v1401, %v36
  %v1710 = vmul.f32 %v1405, %v37
  %v1711 = vmul.f32 %v1409, %v38
  %v1712 = vmul.f32 %v1413, %v39
  %v1713 = vmul.f32 %v1417, %v40
  %v1714 = vmul.f32 %v1421, %v33
  %v1715 = vmul.f32 %v1425, %v34
  %v1716 = vmul.f32 %v1429, %v35
  %v1717 = vmul.f32 %v1433, %v36
  %v1718 = vmul.f32 %v1437, %v37
  %v1719 = vmul.f32 %v1441, %v38
  %v1720 = vmul.f32 %v1445, %v39
  %v1721 = vmul.f32 %v1449, %v40
  %v1722 = vmul.f32 %v1453, %v33
  %v1723 = vmul.f32 %v1457, %v34
  %v1724 = vmul.f32 %v1461, %v35
  %v1725 = vmul.f32 %v1465, %v36
  %v1726 = vmul.f32 %v1469, %v37
  %v1727 = vmul.f32 %v1473, %v38
  %v1728 = vmul.f32 %v1477, %v39
  %v1729 = vmul.f32 %v1481, %v40
  %v1730 = vmul.f32 %v1485, %v33
  %v1731 = vmul.f32 %v1489, %v34
  %v1732 = vmul.f32 %v1493, %v35
  %v1733 = vmul.f32 %v1497, %v36
  %v1734 = vmul.f32 %v1501, %v37
  %v1735 = vmul.f32 %v1505, %v38
  %v1736 = vmul.f32 %v1509, %v39
  %v1737 = vmul.f32 %v1513, %v40
  %v1738 = vmul.f32 %v1517, %v33
  %v1739 = vmul.f32 %v1521, %v34
  %v1740 = vmul.f32 %v1525, %v35
  %v1741 = vmul.f32 %v1529, %v36
  %v1742 = vmul.f32 %v1533, %v37
  %v1743 = vmul.f32 %v1537, %v38
  %v1744 = vmul.f32 %v1541, %v39
  %v1745 = vmul.f32 %v1545, %v40
  %v1746 = vmul.f32 %v1549, %v33
  %v1747 = vmul.f32 %v1553, %v34
  %v1748 = vmul.f32 %v1557, %v35
  %v1749 = vmul.f32 %v1561, %v36
  %v1750 = vmul.f32 %v1565, %v37
  %v1751 = vmul.f32 %v1569, %v38
  %v1752 = vmul.f32 %v1573, %v39
  %v1753 = vmul.f32 %v1577, %v40
  %v1754 = vmul.f32 %v1581, %v33
  %v1755 = vmul.f32 %v1585, %v34
  %v1756 = vmul.f32 %v1589, %v35
  %v1757 = vmul.f32 %v1593, %v36
  %v1758 = vmul.f32 %v1597, %v37
  %v1759 = vmul.f32 %v1601, %v38
  %v1760 = vmul.f32 %v1605, %v39
  %v1761 = vmul.f32 %v1609, %v40
  %v1762 = vmul.f32 %v1613, %v33
  %v1763 = vmul.f32 %v1617, %v34
  %v1764 = vmul.f32 %v1621, %v35
  %v1765 = vmul.f32 %v1625, %v36
  %v1766 = vmul.f32 %v1629, %v37
  %v1767 = vmul.f32 %v1633, %v38
  %v1768 = vmul.f32 %v1637, %v39
  %v1769 = vmul.f32 %v1641, %v40
  %v1770 = vsel %vm105, %v1706, 0.0
  %v1771 = vsel %vm105, %v1707, 0.0
  %v1772 = vadd.f32 %v1770, %v1771
  %v1773 = vsel %vm105, %v1708, 0.0
  %v1774 = vadd.f32 %v1772, %v1773
  %v1775 = vsel %vm105, %v1709, 0.0
  %v1776 = vadd.f32 %v1774, %v1775
  %v1777 = vsel %vm105, %v1710, 0.0
  %v1778 = vadd.f32 %v1776, %v1777
  %v1779 = vsel %vm105, %v1711, 0.0
  %v1780 = vadd.f32 %v1778, %v1779
  %v1781 = vsel %vm105, %v1712, 0.0
  %v1782 = vadd.f32 %v1780, %v1781
  %v1783 = vsel %vm105, %v1713, 0.0
  %v1784 = vadd.f32 %v1782, %v1783
  %v1785 = vsel %vm105, %v1714, 0.0
  %v1786 = vsel %vm105, %v1715, 0.0
  %v1787 = vadd.f32 %v1785, %v1786
  %v1788 = vsel %vm105, %v1716, 0.0
  %v1789 = vadd.f32 %v1787, %v1788
  %v1790 = vsel %vm105, %v1717, 0.0
  %v1791 = vadd.f32 %v1789, %v1790
  %v1792 = vsel %vm105, %v1718, 0.0
  %v1793 = vadd.f32 %v1791, %v1792
  %v1794 = vsel %vm105, %v1719, 0.0
  %v1795 = vadd.f32 %v1793, %v1794
  %v1796 = vsel %vm105, %v1720, 0.0
  %v1797 = vadd.f32 %v1795, %v1796
  %v1798 = vsel %vm105, %v1721, 0.0
  %v1799 = vadd.f32 %v1797, %v1798
  %v1800 = vsel %vm105, %v1722, 0.0
  %v1801 = vsel %vm105, %v1723, 0.0
  %v1802 = vadd.f32 %v1800, %v1801
  %v1803 = vsel %vm105, %v1724, 0.0
  %v1804 = vadd.f32 %v1802, %v1803
  %v1805 = vsel %vm105, %v1725, 0.0
  %v1806 = vadd.f32 %v1804, %v1805
  %v1807 = vsel %vm105, %v1726, 0.0
  %v1808 = vadd.f32 %v1806, %v1807
  %v1809 = vsel %vm105, %v1727, 0.0
  %v1810 = vadd.f32 %v1808, %v1809
  %v1811 = vsel %vm105, %v1728, 0.0
  %v1812 = vadd.f32 %v1810, %v1811
  %v1813 = vsel %vm105, %v1729, 0.0
  %v1814 = vadd.f32 %v1812, %v1813
  %v1815 = vsel %vm105, %v1730, 0.0
  %v1816 = vsel %vm105, %v1731, 0.0
  %v1817 = vadd.f32 %v1815, %v1816
  %v1818 = vsel %vm105, %v1732, 0.0
  %v1819 = vadd.f32 %v1817, %v1818
  %v1820 = vsel %vm105, %v1733, 0.0
  %v1821 = vadd.f32 %v1819, %v1820
  %v1822 = vsel %vm105, %v1734, 0.0
  %v1823 = vadd.f32 %v1821, %v1822
  %v1824 = vsel %vm105, %v1735, 0.0
  %v1825 = vadd.f32 %v1823, %v1824
  %v1826 = vsel %vm105, %v1736, 0.0
  %v1827 = vadd.f32 %v1825, %v1826
  %v1828 = vsel %vm105, %v1737, 0.0
  %v1829 = vadd.f32 %v1827, %v1828
  %v1830 = vsel %vm105, %v1738, 0.0
  %v1831 = vsel %vm105, %v1739, 0.0
  %v1832 = vadd.f32 %v1830, %v1831
  %v1833 = vsel %vm105, %v1740, 0.0
  %v1834 = vadd.f32 %v1832, %v1833
  %v1835 = vsel %vm105, %v1741, 0.0
  %v1836 = vadd.f32 %v1834, %v1835
  %v1837 = vsel %vm105, %v1742, 0.0
  %v1838 = vadd.f32 %v1836, %v1837
  %v1839 = vsel %vm105, %v1743, 0.0
  %v1840 = vadd.f32 %v1838, %v1839
  %v1841 = vsel %vm105, %v1744, 0.0
  %v1842 = vadd.f32 %v1840, %v1841
  %v1843 = vsel %vm105, %v1745, 0.0
  %v1844 = vadd.f32 %v1842, %v1843
  %v1845 = vsel %vm105, %v1746, 0.0
  %v1846 = vsel %vm105, %v1747, 0.0
  %v1847 = vadd.f32 %v1845, %v1846
  %v1848 = vsel %vm105, %v1748, 0.0
  %v1849 = vadd.f32 %v1847, %v1848
  %v1850 = vsel %vm105, %v1749, 0.0
  %v1851 = vadd.f32 %v1849, %v1850
  %v1852 = vsel %vm105, %v1750, 0.0
  %v1853 = vadd.f32 %v1851, %v1852
  %v1854 = vsel %vm105, %v1751, 0.0
  %v1855 = vadd.f32 %v1853, %v1854
  %v1856 = vsel %vm105, %v1752, 0.0
  %v1857 = vadd.f32 %v1855, %v1856
  %v1858 = vsel %vm105, %v1753, 0.0
  %v1859 = vadd.f32 %v1857, %v1858
  %v1860 = vsel %vm105, %v1754, 0.0
  %v1861 = vsel %vm105, %v1755, 0.0
  %v1862 = vadd.f32 %v1860, %v1861
  %v1863 = vsel %vm105, %v1756, 0.0
  %v1864 = vadd.f32 %v1862, %v1863
  %v1865 = vsel %vm105, %v1757, 0.0
  %v1866 = vadd.f32 %v1864, %v1865
  %v1867 = vsel %vm105, %v1758, 0.0
  %v1868 = vadd.f32 %v1866, %v1867
  %v1869 = vsel %vm105, %v1759, 0.0
  %v1870 = vadd.f32 %v1868, %v1869
  %v1871 = vsel %vm105, %v1760, 0.0
  %v1872 = vadd.f32 %v1870, %v1871
  %v1873 = vsel %vm105, %v1761, 0.0
  %v1874 = vadd.f32 %v1872, %v1873
  %v1875 = vsel %vm105, %v1762, 0.0
  %v1876 = vsel %vm105, %v1763, 0.0
  %v1877 = vadd.f32 %v1875, %v1876
  %v1878 = vsel %vm105, %v1764, 0.0
  %v1879 = vadd.f32 %v1877, %v1878
  %v1880 = vsel %vm105, %v1765, 0.0
  %v1881 = vadd.f32 %v1879, %v1880
  %v1882 = vsel %vm105, %v1766, 0.0
  %v1883 = vadd.f32 %v1881, %v1882
  %v1884 = vsel %vm105, %v1767, 0.0
  %v1885 = vadd.f32 %v1883, %v1884
  %v1886 = vsel %vm105, %v1768, 0.0
  %v1887 = vadd.f32 %v1885, %v1886
  %v1888 = vsel %vm105, %v1769, 0.0
  %v1889 = vadd.f32 %v1887, %v1888
  %v1890 = vmul.f32 %v1784, 3.3333333
  %v1891 = vmul.f32 %v1799, 3.3333333
  %v1892 = vmul.f32 %v1814, 3.3333333
  %v1893 = vmul.f32 %v1829, 3.3333333
  %v1894 = vmul.f32 %v1844, 3.3333333
  %v1895 = vmul.f32 %v1859, 3.3333333
  %v1896 = vmul.f32 %v1874, 3.3333333
  %v1897 = vmul.f32 %v1889, 3.3333333
  %1898 = vst.msk [vmem:[%s4] sm:$0xff] %vm105, %v1890
  %1899 = vst.msk [vmem:[%s4 + $0x8] sm:$0xff] %vm105, %v1891
  %1900 = vst.msk [vmem:[%s4 + $0x10] sm:$0xff] %vm105, %v1892
  %1901 = vst.msk [vmem:[%s4 + $0x18] sm:$0xff] %vm105, %v1893
  %1902 = vst.msk [vmem:[%s4 + $0x20] sm:$0xff] %vm105, %v1894
  %1903 = vst.msk [vmem:[%s4 + $0x28] sm:$0xff] %vm105, %v1895
  %1904 = vst.msk [vmem:[%s4 + $0x30] sm:$0xff] %vm105, %v1896
  %1905 = vst.msk [vmem:[%s4 + $0x38] sm:$0xff] %vm105, %v1897
  // Predicated region
  $region18: #{sdpa_dropout.1} parent=0 // pred_check
    _
  $region19: #{sdpa_dropout.1} parent=0 // pred_check_branch
    %1907 = sbr.rel (0) target = $region21
  $region20: #{sdpa_dropout.1} parent=0 // pred_region
    _
  $region21: #{sdpa_dropout.1} parent=0 // pred_fallthru
    _
  // Predicated region
  $region22: #{sdpa_dropout.1} parent=0 // pred_check
    _
  $region23: #{sdpa_dropout.1} parent=0 // pred_check_branch
    %1909 = sbr.rel (0) target = $region25
  $region24: #{sdpa_dropout.1} parent=0 // pred_region
    _
  $region25: #{sdpa_dropout.1} parent=0 // pred_fallthru
    _

</llo_original>
